<compile_context>
chip_gen: v6e
topology: v6e:2x2x1
jax: 0.10.0
libtpu: 0.0.40
codegen_flags: <defaults>
</compile_context>

<pallas_src>
import numpy as np
import jax
import jax.numpy as jnp
from jax.experimental import pallas as pl
from jax.experimental.pallas import tpu as pltpu

HIDDEN = 64          # hidden_dim and CfC units
BACKBONE = 128       # ncps CfC default backbone_units (backbone_layers=1)
HEAD_PAD = 4 * HIDDEN  # 256: [ff1 | ff2 | time(a+b folded) | zero pad]
LECUN_A = 1.7159
LECUN_B = 0.666


def _round_up(n, m):
    return ((n + m - 1) // m) * m


def _bias_layout(c1p, c2p):
    """Lane offsets of each bias segment inside the single (1, total) slab.
    Every segment starts on a 128-lane boundary."""
    off, pos = {}, 0
    for name, width in (("b1", c1p), ("b2", c2p), ("bl1", 2 * HIDDEN),
                        ("bb1", BACKBONE), ("bh1", HEAD_PAD),
                        ("bb2", BACKBONE), ("bh2", HEAD_PAD),
                        ("bout", 2 * HIDDEN)):
        off[name] = (pos, pos + width)
        pos += width
    off["total"] = pos
    return off


# ------------------------------ Pallas kernel -------------------------------

def _make_kernel(c1p, c2p):
    off = _bias_layout(c1p, c2p)
    f32, bf16 = jnp.float32, jnp.bfloat16
    H = HIDDEN

    def kernel(x_ref, s1p_ref, w1_ref, w2_ref, wl1_ref,
               slab128_ref, slab64_ref, bias_ref, out_ref):
        def b(name):
            lo, hi = off[name]
            return bias_ref[:, lo:hi]

        def mm(x, w):
            return jnp.dot(x, w, preferred_element_type=f32)

        # conv1/conv2 as exact dense (im2col-unrolled, lane-padded) GEMMs, then
        # linear1 padded to 128 cols so [a | s1] can be formed by a plain add.
        y = jnp.maximum(mm(x_ref[...].astype(bf16), w1_ref[...]) + b("b1"), 0.0)
        y = jnp.maximum(mm(y.astype(bf16), w2_ref[...]) + b("b2"), 0.0)
        a = jnp.maximum(mm(y.astype(bf16), wl1_ref[...]) + b("bl1"), 0.0)  # (B,128)

        # static, 128-aligned slices of the two weight slabs
        wbb1 = slab128_ref[:, 0:BACKBONE]                                   # (128,128)
        whead1 = slab128_ref[:, BACKBONE:BACKBONE + HEAD_PAD]               # (128,256)
        whead2 = slab128_ref[:, BACKBONE + HEAD_PAD:BACKBONE + 2 * HEAD_PAD]
        wbb2 = slab64_ref[:, 0:BACKBONE]                                    # (64,128)
        w_out = slab64_ref[:, BACKBONE:BACKBONE + 2 * H]                    # (64,128)

        def heads(z, whead, bname):
            g = mm(z.astype(bf16), whead) + b(bname)        # (B, 256)
            ff1 = jnp.tanh(g[:, 0:H])
            ff2 = jnp.tanh(g[:, H:2 * H])
            # ts == 1.0 baked in: time_a + time_b folded into one head at pack time
            t = jax.nn.sigmoid(g[:, 2 * H:3 * H])
            return ff1 + t * (ff2 - ff1)                    # = ff1*(1-t) + t*ff2

        # CfC cell 1: backbone over [a | s1] via a single (128,128) matmul.
        # a has zeros in lanes 64:128, s1p has zeros in lanes 0:64 -> add == concat.
        xin1 = a + s1p_ref[...]
        z1 = LECUN_A * jnp.tanh(LECUN_B * (mm(xin1.astype(bf16), wbb1) + b("bb1")))
        h1 = heads(z1, whead1, "bh1")

        # CfC cell 2: x_t == h == h1 (forward feeds new_s1 as both input and state),
        # so Wx2 + Wh2 are pre-added into one (64,128) weight.
        z2 = LECUN_A * jnp.tanh(LECUN_B * (mm(h1.astype(bf16), wbb2) + b("bb2")))
        h2 = heads(z2, whead2, "bh2")

        logits = mm(h2.astype(bf16), w_out) + b("bout")      # (B, 128) lane-dense

        # single lane-dense output slab [h1 | pad | h2 | pad | logits128]
        out_ref[...] = jnp.zeros_like(out_ref)
        out_ref[:, 0:H] = h1
        out_ref[:, 2 * H:3 * H] = h2
        out_ref[:, 4 * H:6 * H] = logits

    return kernel


# --------------------------------- wrapper -----------------------------------

def actor_cfc_forward(x_nchw, states, packed):
    """x_nchw: (B, 3, H, W) f32. states: [s1, s2], each (B, 64); s2 is unused
    (mirrors the PyTorch forward). Returns (logits (B, A), [new_s1, new_s2])."""
    s1 = states[0]
    B = x_nchw.shape[0]
    # NCHW -> NHWC -> flat: one-time layout plumbing at the API boundary.
    x_flat = jnp.transpose(x_nchw, (0, 2, 3, 1)).reshape(B, -1)
    # s1 shifted into lanes 64:128 so the kernel forms [a | s1] with an add.
    s1_pad = jnp.pad(s1.astype(jnp.float32), ((0, 0), (HIDDEN, 0)))

    c1p, c2p, A = packed["c1p"], packed["c2p"], packed["action_space"]
    operands = (x_flat, s1_pad, packed["w1"], packed["w2"], packed["wl1"],
                packed["slab128"], packed["slab64"], packed["bias"])

    in_dim = x_flat.shape[1]
    mm_dims = ((in_dim, c1p), (c1p, c2p), (c2p, 2 * HIDDEN), (2 * HIDDEN, BACKBONE),
               (BACKBONE, HEAD_PAD), (HIDDEN, BACKBONE), (BACKBONE, HEAD_PAD),
               (HIDDEN, 2 * HIDDEN))
    flops = 2 * B * sum(m * n for m, n in mm_dims)
    transcendentals = B * (2 * BACKBONE + 2 * 3 * HIDDEN)
    bytes_accessed = int(sum(o.size * o.dtype.itemsize for o in operands)
                         + B * 6 * HIDDEN * 4)

    out = pl.pallas_call(
        _make_kernel(c1p, c2p),
        out_shape=jax.ShapeDtypeStruct((B, 6 * HIDDEN), jnp.float32),
        compiler_params=pltpu.CompilerParams(vmem_limit_bytes=32 * 1024 * 1024),
        cost_estimate=pl.CostEstimate(flops=flops,
                                      transcendentals=transcendentals,
                                      bytes_accessed=bytes_accessed),
    )(*operands)

    h1 = out[:, :HIDDEN]
    h2 = out[:, 2 * HIDDEN:3 * HIDDEN]
    logits = out[:, 4 * HIDDEN:4 * HIDDEN + A]
    return logits, [h1, h2]


# --------------------------- parameter construction ---------------------------

def _conv3x3_to_dense(w_hwio, bias, H, W):
    """Exact dense (im2col-unrolled) matrix for a VALID 3x3 conv, NHWC flatten.
    Returns (H*W*Cin, Ho*Wo*Cout) weight and (1, Ho*Wo*Cout) bias."""
    w_np = np.asarray(w_hwio, np.float32)
    kh, kw, cin, cout = w_np.shape
    Ho, Wo = H - kh + 1, W - kw + 1
    dense = np.zeros((H, W, cin, Ho, Wo, cout), np.float32)
    for oh in range(Ho):
        for ow in range(Wo):
            for i in range(kh):
                for j in range(kw):
                    dense[oh + i, ow + j, :, oh, ow, :] += w_np[i, j]
    dense = dense.reshape(H * W * cin, Ho * Wo * cout)
    b_full = np.tile(np.asarray(bias, np.float32), Ho * Wo).reshape(1, Ho * Wo * cout)
    return jnp.asarray(dense), jnp.asarray(b_full), (Ho, Wo)


def make_raw_params(key, action_space, hidden_dim=HIDDEN, img_hw=(8, 8)):
    H, W = img_hw
    ks = jax.random.split(key, 6)

    def lin(k, fan_in, shape):
        return (jax.random.normal(k, shape, jnp.float32)
                / np.float32(np.sqrt(fan_in)))

    # conv weights in HWIO layout
    w_c1 = lin(ks[0], 3 * 3 * 3, (3, 3, 3, 16))
    b_c1 = jnp.zeros((16,), jnp.float32)
    w_c2 = lin(ks[1], 3 * 3 * 16, (3, 3, 16, 32))
    b_c2 = jnp.zeros((32,), jnp.float32)
    Ho2, Wo2 = H - 4, W - 4
    flat = Ho2 * Wo2 * 32
    w_l1 = lin(ks[2], flat, (flat, hidden_dim))
    b_l1 = jnp.zeros((1, hidden_dim), jnp.float32)

    def cfc_raw(kbase, in_dim):
        kk = jax.random.split(kbase, 6)
        wx = lin(kk[0], in_dim + HIDDEN, (in_dim, BACKBONE))
        wh = lin(kk[1], in_dim + HIDDEN, (HIDDEN, BACKBONE))
        bb = jnp.zeros((1, BACKBONE), jnp.float32)
        heads_w = [lin(kk[2 + i], BACKBONE, (BACKBONE, HIDDEN)) for i in range(4)]
        heads_b = [jnp.zeros((1, HIDDEN), jnp.float32) for _ in range(4)]
        return (wx, wh, bb, heads_w, heads_b)

    cfc1 = cfc_raw(ks[3], hidden_dim)
    cfc2 = cfc_raw(ks[4], HIDDEN)

    # layer_init(nn.Linear(64, action_space), std=1.0): orthogonal, zero bias
    w_out = jax.nn.initializers.orthogonal(scale=1.0)(
        ks[5], (HIDDEN, action_space), jnp.float32)
    b_out = jnp.zeros((1, action_space), jnp.float32)

    return dict(conv1=(w_c1, b_c1), conv2=(w_c2, b_c2), linear1=(w_l1, b_l1),
                cfc1=cfc1, cfc2=cfc2, out=(w_out, b_out), img_hw=(H, W))


def pack_kernel_params(raw):
    """Fold + pad + slab-pack the raw parameters for the fused kernel."""
    H, W = raw["img_hw"]
    w_c1, b_c1 = raw["conv1"]
    w_c2, b_c2 = raw["conv2"]
    w1d, b1d, (Ho1, Wo1) = _conv3x3_to_dense(w_c1, b_c1, H, W)
    w2d, b2d, _ = _conv3x3_to_dense(w_c2, b_c2, Ho1, Wo1)

    c1, c2 = w1d.shape[1], w2d.shape[1]
    c1p, c2p = _round_up(c1, 128), _round_up(c2, 128)

    # lane-pad the conv GEMMs to 128-multiples (zeros are exact no-ops)
    w1d = jnp.pad(w1d, ((0, 0), (0, c1p - c1)))
    b1d = jnp.pad(b1d, ((0, 0), (0, c1p - c1)))
    w2d = jnp.pad(w2d, ((0, c1p - c1), (0, c2p - c2)))
    b2d = jnp.pad(b2d, ((0, 0), (0, c2p - c2)))

    # linear1 padded to 128 output lanes (upper 64 cols zero) -> enables the
    # "[a | s1] by addition" trick in the kernel.
    w_l1, b_l1 = raw["linear1"]
    w_l1 = jnp.pad(w_l1, ((0, c2p - c2), (0, HIDDEN)))
    b_l1 = jnp.pad(b_l1, ((0, 0), (0, HIDDEN)))

    def fold_cfc(cfc, fold_input_and_state):
        wx, wh, bb, hw, hb = cfc
        # cfc2: x_t == h  ->  Wx + Wh ;  cfc1: vstack for the [a | s1] operand
        wbb = (wx + wh) if fold_input_and_state else jnp.concatenate([wx, wh], axis=0)
        wt = hw[2] + hw[3]            # ts == 1.0: time_a + time_b folded
        bt = hb[2] + hb[3]
        zw = jnp.zeros((BACKBONE, HIDDEN), jnp.float32)
        zb = jnp.zeros((1, HIDDEN), jnp.float32)
        whead = jnp.concatenate([hw[0], hw[1], wt, zw], axis=1)   # (128, 256)
        bhead = jnp.concatenate([hb[0], hb[1], bt, zb], axis=1)   # (1, 256)
        return wbb, bb, whead, bhead

    wbb1, bb1, whead1, bhead1 = fold_cfc(raw["cfc1"], False)
    wbb2, bb2, whead2, bhead2 = fold_cfc(raw["cfc2"], True)

    w_out, b_out = raw["out"]
    A = w_out.shape[1]
    w_out = jnp.pad(w_out, ((0, 0), (0, 2 * HIDDEN - A)))     # (64, 128)
    b_out = jnp.pad(b_out, ((0, 0), (0, 2 * HIDDEN - A)))

    slab128 = jnp.concatenate([wbb1, whead1, whead2], axis=1)  # (128, 640)
    slab64 = jnp.concatenate([wbb2, w_out], axis=1)            # (64, 256)
    bias = jnp.concatenate([b1d, b2d, b_l1, bb1, bhead1, bb2, bhead2, b_out],
                           axis=1).astype(jnp.float32)
    assert bias.shape[1] == _bias_layout(c1p, c2p)["total"]

    bf = jnp.bfloat16
    return dict(w1=w1d.astype(bf), w2=w2d.astype(bf), wl1=w_l1.astype(bf),
                slab128=slab128.astype(bf), slab64=slab64.astype(bf),
                bias=bias, c1p=c1p, c2p=c2p, action_space=A)


# ----------------------------- pure-JAX reference -----------------------------

def _lecun_tanh(x):
    return LECUN_A * jnp.tanh(LECUN_B * x)


def _cfc_cell_ref(x_t, h, cfc):
    wx, wh, bb, heads_w, heads_b = cfc
    z = _lecun_tanh(x_t @ wx + h @ wh + bb)
    ff1 = jnp.tanh(z @ heads_w[0] + heads_b[0])
    ff2 = jnp.tanh(z @ heads_w[1] + heads_b[1])
    t_a = z @ heads_w[2] + heads_b[2]
    t_b = z @ heads_w[3] + heads_b[3]
    t_gate = jax.nn.sigmoid(t_a * 1.0 + t_b)
    return ff1 * (1.0 - t_gate) + t_gate * ff2


def actor_cfc_ref(x_nchw, states, raw):
    s1 = states[0]
    x = jnp.transpose(x_nchw, (0, 2, 3, 1))          # NHWC
    dn = ('NHWC', 'HWIO', 'NHWC')
    w_c1, b_c1 = raw['conv1']
    w_c2, b_c2 = raw['conv2']
    y = jax.nn.relu(jax.lax.conv_general_dilated(
        x, w_c1, (1, 1), 'VALID', dimension_numbers=dn) + b_c1)
    y = jax.nn.relu(jax.lax.conv_general_dilated(
        y, w_c2, (1, 1), 'VALID', dimension_numbers=dn) + b_c2)
    y = y.reshape(y.shape[0], -1)
    w_l1, b_l1 = raw['linear1']
    y = jax.nn.relu(y @ w_l1 + b_l1)
    h1 = _cfc_cell_ref(y, s1, raw['cfc1'])
    h2 = _cfc_cell_ref(h1, h1, raw['cfc2'])
    w_out, b_out = raw['out']
    return h2 @ w_out + b_out, [h1, h2]


# ------------------------------------ main ------------------------------------

if __name__ == "__main__":
    B, H_IMG, W_IMG, ACTIONS = 2, 8, 8, 7
    key = jax.random.PRNGKey(0)
    kx, ks, kp = jax.random.split(key, 3)

    x = jax.random.normal(kx, (B, 3, H_IMG, W_IMG), jnp.float32)
    s_init = 0.1 * jax.random.normal(ks, (2, B, HIDDEN), jnp.float32)
    states = [s_init[0], s_init[1]]     # second state unused, as in the module

    raw = make_raw_params(kp, ACTIONS, hidden_dim=HIDDEN, img_hw=(H_IMG, W_IMG))
    packed = pack_kernel_params(raw)

    logits, (h1, h2) = actor_cfc_forward(x, states, packed)
    jax.block_until_ready((logits, h1, h2))

    logits_ref, (h1_ref, h2_ref) = actor_cfc_ref(x, states, raw)
    assert logits.shape == (B, ACTIONS)
    assert h1.shape == (B, HIDDEN) and h2.shape == (B, HIDDEN)
    # bf16 matmul operands (f32 accumulation) vs the pure-f32 reference -> use
    # a bf16-appropriate tolerance.
    assert jnp.allclose(logits, logits_ref, atol=5e-2, rtol=5e-2)
    assert jnp.allclose(h1, h1_ref, atol=5e-2, rtol=5e-2)
    assert jnp.allclose(h2, h2_ref, atol=5e-2, rtol=5e-2)

    print("KERNEL_OK")
</pallas_src>

<mosaic_0001>
module attributes {stable_mosaic.version = 11 : i64} {
  func.func @kernel(%arg0: memref<2x192xf32, #tpu.memory_space<vmem>>, %arg1: memref<2x128xf32, #tpu.memory_space<vmem>>, %arg2: memref<192x640xbf16, #tpu.memory_space<vmem>>, %arg3: memref<640x512xbf16, #tpu.memory_space<vmem>>, %arg4: memref<512x128xbf16, #tpu.memory_space<vmem>>, %arg5: memref<128x640xbf16, #tpu.memory_space<vmem>>, %arg6: memref<64x256xbf16, #tpu.memory_space<vmem>>, %arg7: memref<1x2176xf32, #tpu.memory_space<vmem>>, %arg8: memref<2x384xf32, #tpu.memory_space<vmem>>) attributes {dimension_semantics = [], scalar_prefetch = 0 : i64, scratch_operands = 0 : i64, tpu.core_type = #tpu.core_type<tc>} {
    %c0 = arith.constant 0 : index
    %c0_0 = arith.constant 0 : index
    %0 = vector.load %arg0[%c0, %c0_0] : memref<2x192xf32, #tpu.memory_space<vmem>>, vector<2x192xf32>
    %1 = arith.truncf %0 : vector<2x192xf32> to vector<2x192xbf16>
    %c0_1 = arith.constant 0 : index
    %c0_2 = arith.constant 0 : index
    %2 = vector.load %arg2[%c0_1, %c0_2] : memref<192x640xbf16, #tpu.memory_space<vmem>>, vector<192x640xbf16>
    %cst = arith.constant dense<0.000000e+00> : vector<2x640xf32>
    %3 = tpu.matmul %1, %2, %cst {dimension_numbers = #tpu.dot_dimension_numbers<[1], [0], [0], [1], [0, 0, 1, 1], [], []>} : vector<2x192xbf16>, vector<192x640xbf16>, vector<2x640xf32> -> vector<2x640xf32>
    %c0_3 = arith.constant 0 : index
    %c0_4 = arith.constant 0 : index
    %4 = vector.load %arg7[%c0_3, %c0_4] : memref<1x2176xf32, #tpu.memory_space<vmem>>, vector<1x640xf32>
    %5 = vector.broadcast %4 : vector<1x640xf32> to vector<2x640xf32>
    %6 = arith.addf %3, %5 : vector<2x640xf32>
    %cst_5 = arith.constant 0.000000e+00 : f32
    %7 = vector.broadcast %cst_5 : f32 to vector<2x640xf32>
    %8 = arith.maximumf %6, %7 : vector<2x640xf32>
    %9 = arith.truncf %8 : vector<2x640xf32> to vector<2x640xbf16>
    %c0_6 = arith.constant 0 : index
    %c0_7 = arith.constant 0 : index
    %10 = vector.load %arg3[%c0_6, %c0_7] : memref<640x512xbf16, #tpu.memory_space<vmem>>, vector<640x512xbf16>
    %cst_8 = arith.constant dense<0.000000e+00> : vector<2x512xf32>
    %11 = tpu.matmul %9, %10, %cst_8 {dimension_numbers = #tpu.dot_dimension_numbers<[1], [0], [0], [1], [0, 0, 1, 1], [], []>} : vector<2x640xbf16>, vector<640x512xbf16>, vector<2x512xf32> -> vector<2x512xf32>
    %c0_9 = arith.constant 0 : index
    %c640 = arith.constant 640 : index
    %12 = vector.load %arg7[%c0_9, %c640] : memref<1x2176xf32, #tpu.memory_space<vmem>>, vector<1x512xf32>
    %13 = vector.broadcast %12 : vector<1x512xf32> to vector<2x512xf32>
    %14 = arith.addf %11, %13 : vector<2x512xf32>
    %cst_10 = arith.constant 0.000000e+00 : f32
    %15 = vector.broadcast %cst_10 : f32 to vector<2x512xf32>
    %16 = arith.maximumf %14, %15 : vector<2x512xf32>
    %17 = arith.truncf %16 : vector<2x512xf32> to vector<2x512xbf16>
    %c0_11 = arith.constant 0 : index
    %c0_12 = arith.constant 0 : index
    %18 = vector.load %arg4[%c0_11, %c0_12] : memref<512x128xbf16, #tpu.memory_space<vmem>>, vector<512x128xbf16>
    %cst_13 = arith.constant dense<0.000000e+00> : vector<2x128xf32>
    %19 = tpu.matmul %17, %18, %cst_13 {dimension_numbers = #tpu.dot_dimension_numbers<[1], [0], [0], [1], [0, 0, 1, 1], [], []>} : vector<2x512xbf16>, vector<512x128xbf16>, vector<2x128xf32> -> vector<2x128xf32>
    %c0_14 = arith.constant 0 : index
    %c1152 = arith.constant 1152 : index
    %20 = vector.load %arg7[%c0_14, %c1152] : memref<1x2176xf32, #tpu.memory_space<vmem>>, vector<1x128xf32>
    %21 = vector.broadcast %20 : vector<1x128xf32> to vector<2x128xf32>
    %22 = arith.addf %19, %21 : vector<2x128xf32>
    %cst_15 = arith.constant 0.000000e+00 : f32
    %23 = vector.broadcast %cst_15 : f32 to vector<2x128xf32>
    %24 = arith.maximumf %22, %23 : vector<2x128xf32>
    %c0_16 = arith.constant 0 : index
    %c0_17 = arith.constant 0 : index
    %25 = vector.load %arg5[%c0_16, %c0_17] : memref<128x640xbf16, #tpu.memory_space<vmem>>, vector<128x128xbf16>
    %c0_18 = arith.constant 0 : index
    %c128 = arith.constant 128 : index
    %26 = vector.load %arg5[%c0_18, %c128] : memref<128x640xbf16, #tpu.memory_space<vmem>>, vector<128x256xbf16>
    %c0_19 = arith.constant 0 : index
    %c384 = arith.constant 384 : index
    %27 = vector.load %arg5[%c0_19, %c384] : memref<128x640xbf16, #tpu.memory_space<vmem>>, vector<128x256xbf16>
    %c0_20 = arith.constant 0 : index
    %c0_21 = arith.constant 0 : index
    %28 = vector.load %arg6[%c0_20, %c0_21] : memref<64x256xbf16, #tpu.memory_space<vmem>>, vector<64x128xbf16>
    %c0_22 = arith.constant 0 : index
    %c128_23 = arith.constant 128 : index
    %29 = vector.load %arg6[%c0_22, %c128_23] : memref<64x256xbf16, #tpu.memory_space<vmem>>, vector<64x128xbf16>
    %c0_24 = arith.constant 0 : index
    %c0_25 = arith.constant 0 : index
    %30 = vector.load %arg1[%c0_24, %c0_25] : memref<2x128xf32, #tpu.memory_space<vmem>>, vector<2x128xf32>
    %31 = arith.addf %24, %30 : vector<2x128xf32>
    %32 = arith.truncf %31 : vector<2x128xf32> to vector<2x128xbf16>
    %cst_26 = arith.constant dense<0.000000e+00> : vector<2x128xf32>
    %33 = tpu.matmul %32, %25, %cst_26 {dimension_numbers = #tpu.dot_dimension_numbers<[1], [0], [0], [1], [0, 0, 1, 1], [], []>} : vector<2x128xbf16>, vector<128x128xbf16>, vector<2x128xf32> -> vector<2x128xf32>
    %c0_27 = arith.constant 0 : index
    %c1280 = arith.constant 1280 : index
    %34 = vector.load %arg7[%c0_27, %c1280] : memref<1x2176xf32, #tpu.memory_space<vmem>>, vector<1x128xf32>
    %35 = vector.broadcast %34 : vector<1x128xf32> to vector<2x128xf32>
    %36 = arith.addf %33, %35 : vector<2x128xf32>
    %cst_28 = arith.constant 6.660000e-01 : f32
    %37 = vector.broadcast %cst_28 : f32 to vector<2x128xf32>
    %38 = arith.mulf %37, %36 : vector<2x128xf32>
    %39 = math.tanh %38 : vector<2x128xf32>
    %cst_29 = arith.constant 1.715900e+00 : f32
    %40 = vector.broadcast %cst_29 : f32 to vector<2x128xf32>
    %41 = arith.mulf %40, %39 : vector<2x128xf32>
    %42 = arith.truncf %41 : vector<2x128xf32> to vector<2x128xbf16>
    %cst_30 = arith.constant dense<0.000000e+00> : vector<2x256xf32>
    %43 = tpu.matmul %42, %26, %cst_30 {dimension_numbers = #tpu.dot_dimension_numbers<[1], [0], [0], [1], [0, 0, 1, 1], [], []>} : vector<2x128xbf16>, vector<128x256xbf16>, vector<2x256xf32> -> vector<2x256xf32>
    %c0_31 = arith.constant 0 : index
    %c1408 = arith.constant 1408 : index
    %44 = vector.load %arg7[%c0_31, %c1408] : memref<1x2176xf32, #tpu.memory_space<vmem>>, vector<1x256xf32>
    %45 = vector.broadcast %44 : vector<1x256xf32> to vector<2x256xf32>
    %46 = arith.addf %43, %45 : vector<2x256xf32>
    %47 = vector.extract_strided_slice %46 {offsets = [0, 0], sizes = [2, 64], strides = [1, 1]} : vector<2x256xf32> to vector<2x64xf32>
    %48 = math.tanh %47 : vector<2x64xf32>
    %49 = vector.extract_strided_slice %46 {offsets = [0, 64], sizes = [2, 64], strides = [1, 1]} : vector<2x256xf32> to vector<2x64xf32>
    %50 = math.tanh %49 : vector<2x64xf32>
    %51 = vector.extract_strided_slice %46 {offsets = [0, 128], sizes = [2, 64], strides = [1, 1]} : vector<2x256xf32> to vector<2x64xf32>
    %52 = arith.negf %51 : vector<2x64xf32>
    %53 = math.exp %52 : vector<2x64xf32>
    %cst_32 = arith.constant 1.000000e+00 : f32
    %54 = vector.broadcast %cst_32 : f32 to vector<2x64xf32>
    %55 = arith.addf %54, %53 : vector<2x64xf32>
    %56 = arith.divf %54, %55 : vector<2x64xf32>
    %57 = arith.subf %50, %48 : vector<2x64xf32>
    %58 = arith.mulf %56, %57 : vector<2x64xf32>
    %59 = arith.addf %48, %58 : vector<2x64xf32>
    %60 = arith.truncf %59 : vector<2x64xf32> to vector<2x64xbf16>
    %cst_33 = arith.constant dense<0.000000e+00> : vector<2x128xf32>
    %61 = tpu.matmul %60, %28, %cst_33 {dimension_numbers = #tpu.dot_dimension_numbers<[1], [0], [0], [1], [0, 0, 1, 1], [], []>} : vector<2x64xbf16>, vector<64x128xbf16>, vector<2x128xf32> -> vector<2x128xf32>
    %c0_34 = arith.constant 0 : index
    %c1664 = arith.constant 1664 : index
    %62 = vector.load %arg7[%c0_34, %c1664] : memref<1x2176xf32, #tpu.memory_space<vmem>>, vector<1x128xf32>
    %63 = vector.broadcast %62 : vector<1x128xf32> to vector<2x128xf32>
    %64 = arith.addf %61, %63 : vector<2x128xf32>
    %cst_35 = arith.constant 6.660000e-01 : f32
    %65 = vector.broadcast %cst_35 : f32 to vector<2x128xf32>
    %66 = arith.mulf %65, %64 : vector<2x128xf32>
    %67 = math.tanh %66 : vector<2x128xf32>
    %cst_36 = arith.constant 1.715900e+00 : f32
    %68 = vector.broadcast %cst_36 : f32 to vector<2x128xf32>
    %69 = arith.mulf %68, %67 : vector<2x128xf32>
    %70 = arith.truncf %69 : vector<2x128xf32> to vector<2x128xbf16>
    %cst_37 = arith.constant dense<0.000000e+00> : vector<2x256xf32>
    %71 = tpu.matmul %70, %27, %cst_37 {dimension_numbers = #tpu.dot_dimension_numbers<[1], [0], [0], [1], [0, 0, 1, 1], [], []>} : vector<2x128xbf16>, vector<128x256xbf16>, vector<2x256xf32> -> vector<2x256xf32>
    %c0_38 = arith.constant 0 : index
    %c1792 = arith.constant 1792 : index
    %72 = vector.load %arg7[%c0_38, %c1792] : memref<1x2176xf32, #tpu.memory_space<vmem>>, vector<1x256xf32>
    %73 = vector.broadcast %72 : vector<1x256xf32> to vector<2x256xf32>
    %74 = arith.addf %71, %73 : vector<2x256xf32>
    %75 = vector.extract_strided_slice %74 {offsets = [0, 0], sizes = [2, 64], strides = [1, 1]} : vector<2x256xf32> to vector<2x64xf32>
    %76 = math.tanh %75 : vector<2x64xf32>
    %77 = vector.extract_strided_slice %74 {offsets = [0, 64], sizes = [2, 64], strides = [1, 1]} : vector<2x256xf32> to vector<2x64xf32>
    %78 = math.tanh %77 : vector<2x64xf32>
    %79 = vector.extract_strided_slice %74 {offsets = [0, 128], sizes = [2, 64], strides = [1, 1]} : vector<2x256xf32> to vector<2x64xf32>
    %80 = arith.negf %79 : vector<2x64xf32>
    %81 = math.exp %80 : vector<2x64xf32>
    %cst_39 = arith.constant 1.000000e+00 : f32
    %82 = vector.broadcast %cst_39 : f32 to vector<2x64xf32>
    %83 = arith.addf %82, %81 : vector<2x64xf32>
    %84 = arith.divf %82, %83 : vector<2x64xf32>
    %85 = arith.subf %78, %76 : vector<2x64xf32>
    %86 = arith.mulf %84, %85 : vector<2x64xf32>
    %87 = arith.addf %76, %86 : vector<2x64xf32>
    %88 = arith.truncf %87 : vector<2x64xf32> to vector<2x64xbf16>
    %cst_40 = arith.constant dense<0.000000e+00> : vector<2x128xf32>
    %89 = tpu.matmul %88, %29, %cst_40 {dimension_numbers = #tpu.dot_dimension_numbers<[1], [0], [0], [1], [0, 0, 1, 1], [], []>} : vector<2x64xbf16>, vector<64x128xbf16>, vector<2x128xf32> -> vector<2x128xf32>
    %c0_41 = arith.constant 0 : index
    %c2048 = arith.constant 2048 : index
    %90 = vector.load %arg7[%c0_41, %c2048] : memref<1x2176xf32, #tpu.memory_space<vmem>>, vector<1x128xf32>
    %91 = vector.broadcast %90 : vector<1x128xf32> to vector<2x128xf32>
    %92 = arith.addf %89, %91 : vector<2x128xf32>
    %cst_42 = arith.constant 0.000000e+00 : f32
    %93 = vector.broadcast %cst_42 : f32 to vector<2x384xf32>
    %c0_43 = arith.constant 0 : index
    %c0_44 = arith.constant 0 : index
    %94 = vector.load %arg8[%c0_43, %c0_44] : memref<2x384xf32, #tpu.memory_space<vmem>>, vector<2x384xf32>
    tpu.vector_store %arg8[%c0_43, %c0_44], %93 {strides = array<i32>} : memref<2x384xf32, #tpu.memory_space<vmem>>, vector<2x384xf32>,
    %c0_45 = arith.constant 0 : index
    %c0_46 = arith.constant 0 : index
    %95 = vector.load %arg8[%c0_45, %c0_46] : memref<2x384xf32, #tpu.memory_space<vmem>>, vector<2x64xf32>
    tpu.vector_store %arg8[%c0_45, %c0_46], %59 {strides = array<i32>} : memref<2x384xf32, #tpu.memory_space<vmem>>, vector<2x64xf32>,
    %c0_47 = arith.constant 0 : index
    %c128_48 = arith.constant 128 : index
    %96 = vector.load %arg8[%c0_47, %c128_48] : memref<2x384xf32, #tpu.memory_space<vmem>>, vector<2x64xf32>
    tpu.vector_store %arg8[%c0_47, %c128_48], %87 {strides = array<i32>} : memref<2x384xf32, #tpu.memory_space<vmem>>, vector<2x64xf32>,
    %c0_49 = arith.constant 0 : index
    %c256 = arith.constant 256 : index
    %97 = vector.load %arg8[%c0_49, %c256] : memref<2x384xf32, #tpu.memory_space<vmem>>, vector<2x128xf32>
    tpu.vector_store %arg8[%c0_49, %c256], %92 {strides = array<i32>} : memref<2x384xf32, #tpu.memory_space<vmem>>, vector<2x128xf32>,
    return
  }
}

</mosaic_0001>

<llo_original>
// kernel: tpu_custom_call.1
$region0: #{tpu_custom_call.1}
  #allocation0 [shape = 'u32[]', space=smem, size = 0x4, offset = 0x4, fixed_abs, tag = 'smem constant byte address 0x4 - core index']
  #allocation1 [shape = 'u32[144,128]{1,0:T(1,128)}', space=vmem, size = 0x12000, scoped, tag = 'internal scratch']
  %s0 = inlined_call_operand.hbm [shape: f32[2,192], index: 0, kind: input, shape index: {}]
  %s1 = inlined_call_operand.hbm [shape: f32[2,128], index: 1, kind: input, shape index: {}]
  %s2 = inlined_call_operand.hbm [shape: bf16[192,640], index: 2, kind: input, shape index: {}]
  %s3 = inlined_call_operand.hbm [shape: bf16[640,512], index: 3, kind: input, shape index: {}]
  %s4 = inlined_call_operand.hbm [shape: bf16[512,128], index: 4, kind: input, shape index: {}]
  %s5 = inlined_call_operand.hbm [shape: bf16[128,640], index: 5, kind: input, shape index: {}]
  %s6 = inlined_call_operand.hbm [shape: bf16[64,256], index: 6, kind: input, shape index: {}]
  %s7 = inlined_call_operand.hbm [shape: f32[1,2176], index: 7, kind: input, shape index: {}]
  %s8 = inlined_call_operand.hbm [shape: f32[2,384], index: 8, kind: output, shape index: {}]
  %s9 = sld [smem:[#allocation0]]
  $region74: #{tpu_custom_call.1} parent=0
    _
  %s11 = ssub.s32 1, %s9
  %s12 = scalar_select 0, %s11, %s9
  $region1: #{tpu_custom_call.1} parent=0
    #allocation2 [shape = 'u8[2048]{0}', space=vmem, size = 0x800, scoped, tag = 'input window, operand 0, single buffered']
    #allocation3 [shape = 's32[1]{0}', space=sflag, size = 0x4, scoped, tag = 'scoped memory for tpu_custom_call.1']
    #allocation4 [shape = 's32[1]{0}', space=sflag, size = 0x4, scoped, tag = 'scoped memory for tpu_custom_call.1']
    #allocation5 [shape = 'u8[1024]{0}', space=vmem, size = 0x400, scoped, tag = 'input window, operand 1, single buffered']
    #allocation6 [shape = 's32[1]{0}', space=sflag, size = 0x4, scoped, tag = 'scoped memory for tpu_custom_call.1']
    #allocation7 [shape = 'u8[245760]{0}', space=vmem, size = 0x3c000, scoped, tag = 'input window, operand 2, single buffered']
    #allocation8 [shape = 'u8[655360]{0}', space=vmem, size = 0xa0000, scoped, tag = 'input window, operand 3, single buffered']
    #allocation9 [shape = 's32[1]{0}', space=sflag, size = 0x4, scoped, tag = 'scoped memory for tpu_custom_call.1']
    #allocation10 [shape = 'u8[131072]{0}', space=vmem, size = 0x20000, scoped, tag = 'input window, operand 4, single buffered']
    #allocation11 [shape = 'u8[163840]{0}', space=vmem, size = 0x28000, scoped, tag = 'input window, operand 5, single buffered']
    #allocation12 [shape = 's32[1]{0}', space=sflag, size = 0x4, scoped, tag = 'scoped memory for tpu_custom_call.1']
    #allocation13 [shape = 'u8[32768]{0}', space=vmem, size = 0x8000, scoped, tag = 'input window, operand 6, single buffered']
    #allocation14 [shape = 'u8[8704]{0}', space=vmem, size = 0x2400, scoped, tag = 'input window, operand 7, single buffered']
    #allocation15 [shape = 's32[1]{0}', space=sflag, size = 0x4, scoped, tag = 'scoped memory for tpu_custom_call.1']
    #allocation16 [shape = 'u8[3072]{0}', space=vmem, size = 0xc00, scoped, tag = 'output window, operand 0, single buffered']
    %13 = vsyncpa [#allocation3], 0
    %14 = vsyncpa [#allocation6], 0
    %15 = vsyncpa [#allocation9], 0
    %16 = vsyncpa [#allocation12], 0
    %17 = vsyncpa [#allocation15], 0
    %18 = vsyncpa [#allocation4], 0
    // Predicated region
    $region2: #{tpu_custom_call.1} parent=1 // pred_check
      _
    $region3: #{tpu_custom_call.1} parent=1 // pred_check_branch
      %20 = sbr.rel (0) target = $region5
    $region4: #{tpu_custom_call.1} parent=1 // pred_region
      %s22 = ssub.s32 64, 64
      %23 = vsyncadd [#allocation3], %s22
      %s25 = sshll.u32 [#allocation2], 4
      %s26 = int_to_ptr.vmem [resolvable:$true] %s25
      %28 = dma.hbm_to_vmem [thread:$0]  %s0, 64, %s26, [#allocation3]
    $region5: #{tpu_custom_call.1} parent=1 // pred_fallthru
      _
    // Predicated region
    $region6: #{tpu_custom_call.1} parent=1 // pred_check
      _
    $region7: #{tpu_custom_call.1} parent=1 // pred_check_branch
      %30 = sbr.rel (0) target = $region9
    $region8: #{tpu_custom_call.1} parent=1 // pred_region
      %s32 = ssub.s32 32, 32
      %33 = vsyncadd [#allocation6], %s32
      %s35 = sshll.u32 [#allocation5], 4
      %s36 = int_to_ptr.vmem [resolvable:$true] %s35
      %38 = dma.hbm_to_vmem [thread:$0]  %s1, 32, %s36, [#allocation6]
    $region9: #{tpu_custom_call.1} parent=1 // pred_fallthru
      _
    // Predicated region
    $region10: #{tpu_custom_call.1} parent=1 // pred_check
      _
    $region11: #{tpu_custom_call.1} parent=1 // pred_check_branch
      %40 = sbr.rel (0) target = $region13
    $region12: #{tpu_custom_call.1} parent=1 // pred_region
      %s42 = ssub.s32 7680, 7680
      %43 = vsyncadd [#allocation6], %s42
      %s44 = sshll.u32 [#allocation7], 4
      %s45 = int_to_ptr.vmem [resolvable:$true] %s44
      %50 = dma.hbm_to_vmem [thread:$0]  %s2, 7680, %s45, [#allocation6], 320, 320, 20
    $region13: #{tpu_custom_call.1} parent=1 // pred_fallthru
      _
    // Predicated region
    $region14: #{tpu_custom_call.1} parent=1 // pred_check
      _
    $region15: #{tpu_custom_call.1} parent=1 // pred_check_branch
      %52 = sbr.rel (0) target = $region17
    $region16: #{tpu_custom_call.1} parent=1 // pred_region
      %s54 = ssub.s32 20480, 20480
      %55 = vsyncadd [#allocation9], %s54
      %s56 = sshll.u32 [#allocation8], 4
      %s57 = int_to_ptr.vmem [resolvable:$true] %s56
      %62 = dma.hbm_to_vmem [thread:$0]  %s3, 20480, %s57, [#allocation9], 256, 256, 16
    $region17: #{tpu_custom_call.1} parent=1 // pred_fallthru
      _
    // Predicated region
    $region18: #{tpu_custom_call.1} parent=1 // pred_check
      _
    $region19: #{tpu_custom_call.1} parent=1 // pred_check_branch
      %64 = sbr.rel (0) target = $region21
    $region20: #{tpu_custom_call.1} parent=1 // pred_region
      %s66 = ssub.s32 4096, 4096
      %67 = vsyncadd [#allocation9], %s66
      %s68 = sshll.u32 [#allocation10], 4
      %s69 = int_to_ptr.vmem [resolvable:$true] %s68
      %74 = dma.hbm_to_vmem [thread:$0]  %s4, 4096, %s69, [#allocation9], 64, 64, 4
    $region21: #{tpu_custom_call.1} parent=1 // pred_fallthru
      _
    // Predicated region
    $region22: #{tpu_custom_call.1} parent=1 // pred_check
      _
    $region23: #{tpu_custom_call.1} parent=1 // pred_check_branch
      %76 = sbr.rel (0) target = $region25
    $region24: #{tpu_custom_call.1} parent=1 // pred_region
      %s78 = ssub.s32 5120, 5120
      %79 = vsyncadd [#allocation12], %s78
      %s80 = sshll.u32 [#allocation11], 4
      %s81 = int_to_ptr.vmem [resolvable:$true] %s80
      %86 = dma.hbm_to_vmem [thread:$0]  %s5, 5120, %s81, [#allocation12], 320, 320, 20
    $region25: #{tpu_custom_call.1} parent=1 // pred_fallthru
      _
    // Predicated region
    $region26: #{tpu_custom_call.1} parent=1 // pred_check
      _
    $region27: #{tpu_custom_call.1} parent=1 // pred_check_branch
      %88 = sbr.rel (0) target = $region29
    $region28: #{tpu_custom_call.1} parent=1 // pred_region
      %s90 = ssub.s32 1024, 1024
      %91 = vsyncadd [#allocation12], %s90
      %s92 = sshll.u32 [#allocation13], 4
      %s93 = int_to_ptr.vmem [resolvable:$true] %s92
      %98 = dma.hbm_to_vmem [thread:$0]  %s6, 1024, %s93, [#allocation12], 128, 128, 8
    $region29: #{tpu_custom_call.1} parent=1 // pred_fallthru
      _
    // Predicated region
    $region30: #{tpu_custom_call.1} parent=1 // pred_check
      _
    $region31: #{tpu_custom_call.1} parent=1 // pred_check_branch
      %100 = sbr.rel (0) target = $region33
    $region32: #{tpu_custom_call.1} parent=1 // pred_region
      %s102 = ssub.s32 272, 272
      %103 = vsyncadd [#allocation15], %s102
      %s105 = sshll.u32 [#allocation14], 4
      %s106 = int_to_ptr.vmem [resolvable:$true] %s105
      %108 = dma.hbm_to_vmem [thread:$0]  %s7, 272, %s106, [#allocation15]
    $region33: #{tpu_custom_call.1} parent=1 // pred_fallthru
      _
    // Predicated region
    $region34: #{tpu_custom_call.1} parent=1 // pred_check
      _
    $region35: #{tpu_custom_call.1} parent=1 // pred_check_branch
      %110 = sbr.rel (0) target = $region37
    $region36: #{tpu_custom_call.1} parent=1 // pred_region
      %111 = dma.done [#allocation3], 64
    $region37: #{tpu_custom_call.1} parent=1 // pred_fallthru
      _
    // Predicated region
    $region38: #{tpu_custom_call.1} parent=1 // pred_check
      _
    $region39: #{tpu_custom_call.1} parent=1 // pred_check_branch
      %113 = sbr.rel (0) target = $region41
    $region40: #{tpu_custom_call.1} parent=1 // pred_region
      %114 = dma.done [#allocation6], 32
    $region41: #{tpu_custom_call.1} parent=1 // pred_fallthru
      _
    // Predicated region
    $region42: #{tpu_custom_call.1} parent=1 // pred_check
      _
    $region43: #{tpu_custom_call.1} parent=1 // pred_check_branch
      %116 = sbr.rel (0) target = $region45
    $region44: #{tpu_custom_call.1} parent=1 // pred_region
      %117 = dma.done [#allocation6], 7680
    $region45: #{tpu_custom_call.1} parent=1 // pred_fallthru
      _
    // Predicated region
    $region46: #{tpu_custom_call.1} parent=1 // pred_check
      _
    $region47: #{tpu_custom_call.1} parent=1 // pred_check_branch
      %119 = sbr.rel (0) target = $region49
    $region48: #{tpu_custom_call.1} parent=1 // pred_region
      %120 = dma.done [#allocation9], 20480
    $region49: #{tpu_custom_call.1} parent=1 // pred_fallthru
      _
    // Predicated region
    $region50: #{tpu_custom_call.1} parent=1 // pred_check
      _
    $region51: #{tpu_custom_call.1} parent=1 // pred_check_branch
      %122 = sbr.rel (0) target = $region53
    $region52: #{tpu_custom_call.1} parent=1 // pred_region
      %123 = dma.done [#allocation9], 4096
    $region53: #{tpu_custom_call.1} parent=1 // pred_fallthru
      _
    // Predicated region
    $region54: #{tpu_custom_call.1} parent=1 // pred_check
      _
    $region55: #{tpu_custom_call.1} parent=1 // pred_check_branch
      %125 = sbr.rel (0) target = $region57
    $region56: #{tpu_custom_call.1} parent=1 // pred_region
      %126 = dma.done [#allocation12], 5120
    $region57: #{tpu_custom_call.1} parent=1 // pred_fallthru
      _
    // Predicated region
    $region58: #{tpu_custom_call.1} parent=1 // pred_check
      _
    $region59: #{tpu_custom_call.1} parent=1 // pred_check_branch
      %128 = sbr.rel (0) target = $region61
    $region60: #{tpu_custom_call.1} parent=1 // pred_region
      %129 = dma.done [#allocation12], 1024
    $region61: #{tpu_custom_call.1} parent=1 // pred_fallthru
      _
    // Predicated region
    $region62: #{tpu_custom_call.1} parent=1 // pred_check
      _
    $region63: #{tpu_custom_call.1} parent=1 // pred_check_branch
      %131 = sbr.rel (0) target = $region65
    $region64: #{tpu_custom_call.1} parent=1 // pred_region
      %132 = dma.done [#allocation15], 272
    $region65: #{tpu_custom_call.1} parent=1 // pred_fallthru
      _
    %v134 = vld [vmem:[#allocation2] sm:$0xf]
    %v137 = vunpack.c.l.s4 1983009808
    %v138 = vunpack.c.0.s8 %v137
    %v139 = vlaneseq
    %v140 = vshrl.u32 %v139, 7
    %v141 = vsub.s32 %v138, %v140
    %v142 = vrot.slane %v134, %v141
    %v143 = vcombine.high %v142, %v142
    %v146 = vpack.c.bf16 %v142, %v142
    %v147 = vpack.c.bf16 %v143, %v143
    %v148 = vld [vmem:[#allocation7] sm:$0xff]
    %v149 = vld [vmem:[#allocation7 + $0x8] sm:$0xff]
    %v150 = vld [vmem:[#allocation7 + $0x10] sm:$0xf]
    %v151 = vld [vmem:[#allocation7 + $0x14] sm:$0xff]
    %v152 = vld [vmem:[#allocation7 + $0x1c] sm:$0xff]
    %v153 = vld [vmem:[#allocation7 + $0x24] sm:$0xf]
    %v154 = vld [vmem:[#allocation7 + $0x28] sm:$0xff]
    %v155 = vld [vmem:[#allocation7 + $0x30] sm:$0xff]
    %v156 = vld [vmem:[#allocation7 + $0x38] sm:$0xf]
    %v157 = vld [vmem:[#allocation7 + $0x3c] sm:$0xff]
    %v158 = vld [vmem:[#allocation7 + $0x44] sm:$0xff]
    %v159 = vld [vmem:[#allocation7 + $0x4c] sm:$0xf]
    %v160 = vld [vmem:[#allocation7 + $0x50] sm:$0xff]
    %v161 = vld [vmem:[#allocation7 + $0x58] sm:$0xff]
    %v162 = vld [vmem:[#allocation7 + $0x60] sm:$0xf]
    %v163 = vld [vmem:[#allocation7 + $0x64] sm:$0xff]
    %v164 = vld [vmem:[#allocation7 + $0x6c] sm:$0xff]
    %v165 = vld [vmem:[#allocation7 + $0x74] sm:$0xf]
    %v166 = vld [vmem:[#allocation7 + $0x78] sm:$0xff]
    %v167 = vld [vmem:[#allocation7 + $0x80] sm:$0xff]
    %v168 = vld [vmem:[#allocation7 + $0x88] sm:$0xf]
    %v169 = vld [vmem:[#allocation7 + $0x8c] sm:$0xff]
    %v170 = vld [vmem:[#allocation7 + $0x94] sm:$0xff]
    %v171 = vld [vmem:[#allocation7 + $0x9c] sm:$0xf]
    %v172 = vld [vmem:[#allocation7 + $0xa0] sm:$0xff]
    %v173 = vld [vmem:[#allocation7 + $0xa8] sm:$0xff]
    %v174 = vld [vmem:[#allocation7 + $0xb0] sm:$0xf]
    %v175 = vld [vmem:[#allocation7 + $0xb4] sm:$0xff]
    %v176 = vld [vmem:[#allocation7 + $0xbc] sm:$0xff]
    %v177 = vld [vmem:[#allocation7 + $0xc4] sm:$0xf]
    %v178 = vld [vmem:[#allocation7 + $0xc8] sm:$0xff]
    %v179 = vld [vmem:[#allocation7 + $0xd0] sm:$0xff]
    %v180 = vld [vmem:[#allocation7 + $0xd8] sm:$0xf]
    %v181 = vld [vmem:[#allocation7 + $0xdc] sm:$0xff]
    %v182 = vld [vmem:[#allocation7 + $0xe4] sm:$0xff]
    %v183 = vld [vmem:[#allocation7 + $0xec] sm:$0xf]
    %v184 = vld [vmem:[#allocation7 + $0xf0] sm:$0xff]
    %v185 = vld [vmem:[#allocation7 + $0xf8] sm:$0xff]
    %v186 = vld [vmem:[#allocation7 + $0x100] sm:$0xf]
    %v187 = vld [vmem:[#allocation7 + $0x104] sm:$0xff]
    %v188 = vld [vmem:[#allocation7 + $0x10c] sm:$0xff]
    %v189 = vld [vmem:[#allocation7 + $0x114] sm:$0xf]
    %v190 = vld [vmem:[#allocation7 + $0x118] sm:$0xff]
    %v191 = vld [vmem:[#allocation7 + $0x120] sm:$0xff]
    %v192 = vld [vmem:[#allocation7 + $0x128] sm:$0xf]
    %v193 = vld [vmem:[#allocation7 + $0x12c] sm:$0xff]
    %v194 = vld [vmem:[#allocation7 + $0x134] sm:$0xff]
    %v195 = vld [vmem:[#allocation7 + $0x13c] sm:$0xf]
    %v196 = vld [vmem:[#allocation7 + $0x140] sm:$0xff]
    %v197 = vld [vmem:[#allocation7 + $0x148] sm:$0xff]
    %v198 = vld [vmem:[#allocation7 + $0x150] sm:$0xf]
    %v199 = vld [vmem:[#allocation7 + $0x154] sm:$0xff]
    %v200 = vld [vmem:[#allocation7 + $0x15c] sm:$0xff]
    %v201 = vld [vmem:[#allocation7 + $0x164] sm:$0xf]
    %v202 = vld [vmem:[#allocation7 + $0x168] sm:$0xff]
    %v203 = vld [vmem:[#allocation7 + $0x170] sm:$0xff]
    %v204 = vld [vmem:[#allocation7 + $0x178] sm:$0xf]
    %v205 = vld [vmem:[#allocation7 + $0x17c] sm:$0xff]
    %v206 = vld [vmem:[#allocation7 + $0x184] sm:$0xff]
    %v207 = vld [vmem:[#allocation7 + $0x18c] sm:$0xf]
    %v208 = vld [vmem:[#allocation7 + $0x190] sm:$0xff]
    %v209 = vld [vmem:[#allocation7 + $0x198] sm:$0xff]
    %v210 = vld [vmem:[#allocation7 + $0x1a0] sm:$0xf]
    %v211 = vld [vmem:[#allocation7 + $0x1a4] sm:$0xff]
    %v212 = vld [vmem:[#allocation7 + $0x1ac] sm:$0xff]
    %v213 = vld [vmem:[#allocation7 + $0x1b4] sm:$0xf]
    %v214 = vld [vmem:[#allocation7 + $0x1b8] sm:$0xff]
    %v215 = vld [vmem:[#allocation7 + $0x1c0] sm:$0xff]
    %v216 = vld [vmem:[#allocation7 + $0x1c8] sm:$0xf]
    %v217 = vld [vmem:[#allocation7 + $0x1cc] sm:$0xff]
    %v218 = vld [vmem:[#allocation7 + $0x1d4] sm:$0xff]
    %v219 = vld [vmem:[#allocation7 + $0x1dc] sm:$0xf]
    %v220 = vld [vmem:[#allocation14] sm:$0x1f]
    %v222 = vlaneseq
    %v223 = vshrl.u32 %v222, 7
    %v224 = vsub.s32 0, %v223
    %v225 = vrot.slane %v220, %v224
    %v226 = vlaneseq
    %v227 = vshrl.u32 %v226, 7
    %v228 = vsub.s32 1, %v227
    %v229 = vrot.slane %v220, %v228
    %v230 = vlaneseq
    %v231 = vshrl.u32 %v230, 7
    %v232 = vsub.s32 2, %v231
    %v233 = vrot.slane %v220, %v232
    %v234 = vlaneseq
    %v235 = vshrl.u32 %v234, 7
    %v236 = vsub.s32 3, %v235
    %v237 = vrot.slane %v220, %v236
    %v238 = vlaneseq
    %v239 = vshrl.u32 %v238, 7
    %v240 = vsub.s32 4, %v239
    %v241 = vrot.slane %v220, %v240
    %v319 = vunpack.c.l.b16 %v148
    %v320 = vunpack.c.h.b16 %v148
    %v321 = vunpack.c.l.b16 %v149
    %v322 = vunpack.c.h.b16 %v149
    %v323 = vunpack.c.l.b16 %v150
    %v324 = vunpack.c.l.b16 %v151
    %v325 = vunpack.c.h.b16 %v151
    %v326 = vunpack.c.l.b16 %v152
    %v327 = vunpack.c.h.b16 %v152
    %v328 = vunpack.c.l.b16 %v153
    %v329 = vunpack.c.l.b16 %v154
    %v330 = vunpack.c.h.b16 %v154
    %v331 = vunpack.c.l.b16 %v155
    %v332 = vunpack.c.h.b16 %v155
    %v333 = vunpack.c.l.b16 %v156
    %v334 = vunpack.c.l.b16 %v157
    %v335 = vunpack.c.h.b16 %v157
    %v336 = vunpack.c.l.b16 %v158
    %v337 = vunpack.c.h.b16 %v158
    %v338 = vunpack.c.l.b16 %v159
    %v339 = vunpack.c.l.b16 %v160
    %v340 = vunpack.c.h.b16 %v160
    %v341 = vunpack.c.l.b16 %v161
    %v342 = vunpack.c.h.b16 %v161
    %v343 = vunpack.c.l.b16 %v162
    %v344 = vunpack.c.l.b16 %v163
    %v345 = vunpack.c.h.b16 %v163
    %v346 = vunpack.c.l.b16 %v164
    %v347 = vunpack.c.h.b16 %v164
    %v348 = vunpack.c.l.b16 %v165
    %v349 = vunpack.c.l.b16 %v166
    %v350 = vunpack.c.h.b16 %v166
    %v351 = vunpack.c.l.b16 %v167
    %v352 = vunpack.c.h.b16 %v167
    %v353 = vunpack.c.l.b16 %v168
    %v354 = vunpack.c.l.b16 %v169
    %v355 = vunpack.c.h.b16 %v169
    %v356 = vunpack.c.l.b16 %v170
    %v357 = vunpack.c.h.b16 %v170
    %v358 = vunpack.c.l.b16 %v171
    %v359 = vunpack.c.l.b16 %v172
    %v360 = vunpack.c.h.b16 %v172
    %v361 = vunpack.c.l.b16 %v173
    %v362 = vunpack.c.h.b16 %v173
    %v363 = vunpack.c.l.b16 %v174
    %v364 = vunpack.c.l.b16 %v175
    %v365 = vunpack.c.h.b16 %v175
    %v366 = vunpack.c.l.b16 %v176
    %v367 = vunpack.c.h.b16 %v176
    %v368 = vunpack.c.l.b16 %v177
    %v369 = vunpack.c.l.b16 %v178
    %v370 = vunpack.c.h.b16 %v178
    %v371 = vunpack.c.l.b16 %v179
    %v372 = vunpack.c.h.b16 %v179
    %v373 = vunpack.c.l.b16 %v180
    %v374 = vunpack.c.l.b16 %v181
    %v375 = vunpack.c.h.b16 %v181
    %v376 = vunpack.c.l.b16 %v182
    %v377 = vunpack.c.h.b16 %v182
    %v378 = vunpack.c.l.b16 %v183
    %v379 = vunpack.c.l.b16 %v184
    %v380 = vunpack.c.h.b16 %v184
    %v381 = vunpack.c.l.b16 %v185
    %v382 = vunpack.c.h.b16 %v185
    %v383 = vunpack.c.l.b16 %v186
    %v384 = vunpack.c.l.b16 %v187
    %v385 = vunpack.c.h.b16 %v187
    %v386 = vunpack.c.l.b16 %v188
    %v387 = vunpack.c.h.b16 %v188
    %v388 = vunpack.c.l.b16 %v189
    %v389 = vunpack.c.l.b16 %v190
    %v390 = vunpack.c.h.b16 %v190
    %v391 = vunpack.c.l.b16 %v191
    %v392 = vunpack.c.h.b16 %v191
    %v393 = vunpack.c.l.b16 %v192
    %v394 = vunpack.c.l.b16 %v193
    %v395 = vunpack.c.h.b16 %v193
    %v396 = vunpack.c.l.b16 %v194
    %v397 = vunpack.c.h.b16 %v194
    %v398 = vunpack.c.l.b16 %v195
    %v399 = vunpack.c.l.b16 %v196
    %v400 = vunpack.c.h.b16 %v196
    %v401 = vunpack.c.l.b16 %v197
    %v402 = vunpack.c.h.b16 %v197
    %v403 = vunpack.c.l.b16 %v198
    %v404 = vunpack.c.l.b16 %v199
    %v405 = vunpack.c.h.b16 %v199
    %v406 = vunpack.c.l.b16 %v200
    %v407 = vunpack.c.h.b16 %v200
    %v408 = vunpack.c.l.b16 %v201
    %v409 = vunpack.c.l.b16 %v202
    %v410 = vunpack.c.h.b16 %v202
    %v411 = vunpack.c.l.b16 %v203
    %v412 = vunpack.c.h.b16 %v203
    %v413 = vunpack.c.l.b16 %v204
    %v414 = vunpack.c.l.b16 %v205
    %v415 = vunpack.c.h.b16 %v205
    %v416 = vunpack.c.l.b16 %v206
    %v417 = vunpack.c.h.b16 %v206
    %v418 = vunpack.c.l.b16 %v207
    %v419 = vunpack.c.l.b16 %v208
    %v420 = vunpack.c.h.b16 %v208
    %v421 = vunpack.c.l.b16 %v209
    %v422 = vunpack.c.h.b16 %v209
    %v423 = vunpack.c.l.b16 %v210
    %v424 = vunpack.c.l.b16 %v211
    %v425 = vunpack.c.h.b16 %v211
    %v426 = vunpack.c.l.b16 %v212
    %v427 = vunpack.c.h.b16 %v212
    %v428 = vunpack.c.l.b16 %v213
    %v429 = vunpack.c.l.b16 %v214
    %v430 = vunpack.c.h.b16 %v214
    %v431 = vunpack.c.l.b16 %v215
    %v432 = vunpack.c.h.b16 %v215
    %v433 = vunpack.c.l.b16 %v216
    %v434 = vunpack.c.l.b16 %v217
    %v435 = vunpack.c.h.b16 %v217
    %v436 = vunpack.c.l.b16 %v218
    %v437 = vunpack.c.h.b16 %v218
    %v438 = vunpack.c.l.b16 %v219
    %v439 = vpack.c.b16 %v324, %v319
    %v440 = vpack.c.b16 %v325, %v320
    %v441 = vpack.c.b16 %v326, %v321
    %v442 = vpack.c.b16 %v327, %v322
    %v443 = vpack.c.b16 %v328, %v323
    %v444 = vpack.c.b16 %v334, %v329
    %v445 = vpack.c.b16 %v335, %v330
    %v446 = vpack.c.b16 %v336, %v331
    %v447 = vpack.c.b16 %v337, %v332
    %v448 = vpack.c.b16 %v338, %v333
    %v449 = vpack.c.b16 %v344, %v339
    %v450 = vpack.c.b16 %v345, %v340
    %v451 = vpack.c.b16 %v346, %v341
    %v452 = vpack.c.b16 %v347, %v342
    %v453 = vpack.c.b16 %v348, %v343
    %v454 = vpack.c.b16 %v354, %v349
    %v455 = vpack.c.b16 %v355, %v350
    %v456 = vpack.c.b16 %v356, %v351
    %v457 = vpack.c.b16 %v357, %v352
    %v458 = vpack.c.b16 %v358, %v353
    %v459 = vpack.c.b16 %v364, %v359
    %v460 = vpack.c.b16 %v365, %v360
    %v461 = vpack.c.b16 %v366, %v361
    %v462 = vpack.c.b16 %v367, %v362
    %v463 = vpack.c.b16 %v368, %v363
    %v464 = vpack.c.b16 %v374, %v369
    %v465 = vpack.c.b16 %v375, %v370
    %v466 = vpack.c.b16 %v376, %v371
    %v467 = vpack.c.b16 %v377, %v372
    %v468 = vpack.c.b16 %v378, %v373
    %v469 = vpack.c.b16 %v384, %v379
    %v470 = vpack.c.b16 %v385, %v380
    %v471 = vpack.c.b16 %v386, %v381
    %v472 = vpack.c.b16 %v387, %v382
    %v473 = vpack.c.b16 %v388, %v383
    %v474 = vpack.c.b16 %v394, %v389
    %v475 = vpack.c.b16 %v395, %v390
    %v476 = vpack.c.b16 %v396, %v391
    %v477 = vpack.c.b16 %v397, %v392
    %v478 = vpack.c.b16 %v398, %v393
    %v479 = vpack.c.b16 %v404, %v399
    %v480 = vpack.c.b16 %v405, %v400
    %v481 = vpack.c.b16 %v406, %v401
    %v482 = vpack.c.b16 %v407, %v402
    %v483 = vpack.c.b16 %v408, %v403
    %v484 = vpack.c.b16 %v414, %v409
    %v485 = vpack.c.b16 %v415, %v410
    %v486 = vpack.c.b16 %v416, %v411
    %v487 = vpack.c.b16 %v417, %v412
    %v488 = vpack.c.b16 %v418, %v413
    %v489 = vpack.c.b16 %v424, %v419
    %v490 = vpack.c.b16 %v425, %v420
    %v491 = vpack.c.b16 %v426, %v421
    %v492 = vpack.c.b16 %v427, %v422
    %v493 = vpack.c.b16 %v428, %v423
    %v494 = vpack.c.b16 %v434, %v429
    %v495 = vpack.c.b16 %v435, %v430
    %v496 = vpack.c.b16 %v436, %v431
    %v497 = vpack.c.b16 %v437, %v432
    %v498 = vpack.c.b16 %v438, %v433
    %vm559 = vcmask 523264
    %v561 = vsel %vm559, %v147, 0
    %563 = vmatprep.subr.bf16.mxu0 %v475
    %564 = vmatpush1.bf16.msra.mxu0 %v474
    %565 = vmatprep.subr.bf16.mxu0 %v470
    %566 = vmatpush1.bf16.msra.mxu0 %v469
    %567 = vmatprep.subr.bf16.mxu0 %v465
    %568 = vmatpush1.bf16.msra.mxu0 %v464
    %569 = vmatprep.subr.bf16.mxu0 %v460
    %570 = vmatpush1.bf16.msra.mxu0 %v459
    %571 = vmatprep.subr.bf16.mxu0 %v455
    %572 = vmatpush1.bf16.msra.mxu0 %v454
    %573 = vmatprep.subr.bf16.mxu0 %v450
    %574 = vmatpush1.bf16.msra.mxu0 %v449
    %575 = vmatprep.subr.bf16.mxu0 %v445
    %576 = vmatpush1.bf16.msra.mxu0 %v444
    %577 = vmatprep.subr.bf16.mxu0 %v440
    %578 = vmatpush1.bf16.msra.mxu0 %v439
    %579 = vmatprep.subr.bf16.mxu0 0
    %580 = vmatpush2.bf16.msra.mxu0 0
    %581 = vmatprep.subr.bf16.mxu0 0
    %582 = vmatpush2.bf16.msra.mxu0 0
    %583 = vmatprep.subr.bf16.mxu0 0
    %584 = vmatpush2.bf16.msra.mxu0 0
    %585 = vmatprep.subr.bf16.mxu0 0
    %586 = vmatpush2.bf16.msra.mxu0 0
    %587 = vmatprep.subr.bf16.mxu0 %v495
    %588 = vmatpush2.bf16.msra.mxu0 %v494
    %589 = vmatprep.subr.bf16.mxu0 %v490
    %590 = vmatpush2.bf16.msra.mxu0 %v489
    %591 = vmatprep.subr.bf16.mxu0 %v485
    %592 = vmatpush2.bf16.msra.mxu0 %v484
    %593 = vmatprep.subr.bf16.mxu0 %v480
    %594 = vmatpush2.bf16.msra.mxu0 %v479
    %595 = vmatprep.mubr.bf16.mxu0 %v561
    %596 = vmatmul.mubr.bf16.gmra.mxu0 %v146
    %v597 = vpop.f32.mrf.mxu0
    %v598 = vadd.f32 %v225, %v597
    %v599 = vpop.f32.mrf.mxu0
    %v600 = vadd.f32 %v229, %v599
    %v601 = vpop.f32.mrf.mxu0
    %v602 = vpop.f32.mrf.mxu0
    %603 = vdwg.mxu0
    %604 = vmatprep.subr.bf16.mxu0 %v477
    %605 = vmatpush1.bf16.msra.mxu0 %v476
    %606 = vmatprep.subr.bf16.mxu0 %v472
    %607 = vmatpush1.bf16.msra.mxu0 %v471
    %608 = vmatprep.subr.bf16.mxu0 %v467
    %609 = vmatpush1.bf16.msra.mxu0 %v466
    %610 = vmatprep.subr.bf16.mxu0 %v462
    %611 = vmatpush1.bf16.msra.mxu0 %v461
    %612 = vmatprep.subr.bf16.mxu0 %v457
    %613 = vmatpush1.bf16.msra.mxu0 %v456
    %614 = vmatprep.subr.bf16.mxu0 %v452
    %615 = vmatpush1.bf16.msra.mxu0 %v451
    %616 = vmatprep.subr.bf16.mxu0 %v447
    %617 = vmatpush1.bf16.msra.mxu0 %v446
    %618 = vmatprep.subr.bf16.mxu0 %v442
    %619 = vmatpush1.bf16.msra.mxu0 %v441
    %620 = vmatprep.subr.bf16.mxu0 0
    %621 = vmatpush2.bf16.msra.mxu0 0
    %622 = vmatprep.subr.bf16.mxu0 0
    %623 = vmatpush2.bf16.msra.mxu0 0
    %624 = vmatprep.subr.bf16.mxu0 0
    %625 = vmatpush2.bf16.msra.mxu0 0
    %626 = vmatprep.subr.bf16.mxu0 0
    %627 = vmatpush2.bf16.msra.mxu0 0
    %628 = vmatprep.subr.bf16.mxu0 %v497
    %629 = vmatpush2.bf16.msra.mxu0 %v496
    %630 = vmatprep.subr.bf16.mxu0 %v492
    %631 = vmatpush2.bf16.msra.mxu0 %v491
    %632 = vmatprep.subr.bf16.mxu0 %v487
    %633 = vmatpush2.bf16.msra.mxu0 %v486
    %634 = vmatprep.subr.bf16.mxu0 %v482
    %635 = vmatpush2.bf16.msra.mxu0 %v481
    %636 = vmatprep.mubr.bf16.mxu0 %v561
    %637 = vmatmul.mubr.bf16.gmra.mxu0 %v146
    %v638 = vpop.f32.mrf.mxu0
    %v639 = vadd.f32 %v233, %v638
    %v640 = vpop.f32.mrf.mxu0
    %v641 = vadd.f32 %v237, %v640
    %v642 = vpop.f32.mrf.mxu0
    %v643 = vpop.f32.mrf.mxu0
    %644 = vdwg.mxu0
    %645 = vmatprep.subr.bf16.mxu0 0
    %646 = vmatpush1.bf16.msra.mxu0 %v478
    %647 = vmatprep.subr.bf16.mxu0 0
    %648 = vmatpush1.bf16.msra.mxu0 %v473
    %649 = vmatprep.subr.bf16.mxu0 0
    %650 = vmatpush1.bf16.msra.mxu0 %v468
    %651 = vmatprep.subr.bf16.mxu0 0
    %652 = vmatpush1.bf16.msra.mxu0 %v463
    %653 = vmatprep.subr.bf16.mxu0 0
    %654 = vmatpush1.bf16.msra.mxu0 %v458
    %655 = vmatprep.subr.bf16.mxu0 0
    %656 = vmatpush1.bf16.msra.mxu0 %v453
    %657 = vmatprep.subr.bf16.mxu0 0
    %658 = vmatpush1.bf16.msra.mxu0 %v448
    %659 = vmatprep.subr.bf16.mxu0 0
    %660 = vmatpush1.bf16.msra.mxu0 %v443
    %661 = vmatprep.subr.bf16.mxu0 0
    %662 = vmatpush2.bf16.msra.mxu0 0
    %663 = vmatprep.subr.bf16.mxu0 0
    %664 = vmatpush2.bf16.msra.mxu0 0
    %665 = vmatprep.subr.bf16.mxu0 0
    %666 = vmatpush2.bf16.msra.mxu0 0
    %667 = vmatprep.subr.bf16.mxu0 0
    %668 = vmatpush2.bf16.msra.mxu0 0
    %669 = vmatprep.subr.bf16.mxu0 0
    %670 = vmatpush2.bf16.msra.mxu0 %v498
    %671 = vmatprep.subr.bf16.mxu0 0
    %672 = vmatpush2.bf16.msra.mxu0 %v493
    %673 = vmatprep.subr.bf16.mxu0 0
    %674 = vmatpush2.bf16.msra.mxu0 %v488
    %675 = vmatprep.subr.bf16.mxu0 0
    %676 = vmatpush2.bf16.msra.mxu0 %v483
    %677 = vmatprep.mubr.bf16.mxu0 %v561
    %678 = vmatmul.mubr.bf16.gmra.mxu0 %v146
    %v679 = vpop.f32.mrf.mxu0
    %v680 = vadd.f32 %v241, %v679
    %v681 = vpop.f32.mrf.mxu0
    %v682 = vpop.f32.mrf.mxu0
    %v683 = vpop.f32.mrf.mxu0
    %684 = vdwg.mxu0
    %v685 = vmax.f32 %v598, 0.0
    %v686 = vmax.f32 %v600, 0.0
    %v687 = vmax.f32 %v639, 0.0
    %v688 = vmax.f32 %v641, 0.0
    %v689 = vmax.f32 %v680, 0.0
    %v690 = vpack.c.bf16 %v685, %v685
    %v691 = vpack.c.bf16 %v686, %v686
    %v692 = vpack.c.bf16 %v687, %v687
    %v693 = vpack.c.bf16 %v688, %v688
    %v694 = vpack.c.bf16 %v689, %v689
    %v695 = vld [vmem:[#allocation8] sm:$0xff]
    %v696 = vld [vmem:[#allocation8 + $0x8] sm:$0xff]
    %v697 = vld [vmem:[#allocation8 + $0x10] sm:$0xff]
    %v698 = vld [vmem:[#allocation8 + $0x18] sm:$0xff]
    %v699 = vld [vmem:[#allocation8 + $0x20] sm:$0xff]
    %v700 = vld [vmem:[#allocation8 + $0x28] sm:$0xff]
    %v701 = vld [vmem:[#allocation8 + $0x30] sm:$0xff]
    %v702 = vld [vmem:[#allocation8 + $0x38] sm:$0xff]
    %v703 = vld [vmem:[#allocation8 + $0x40] sm:$0xff]
    %v704 = vld [vmem:[#allocation8 + $0x48] sm:$0xff]
    %v705 = vld [vmem:[#allocation8 + $0x50] sm:$0xff]
    %v706 = vld [vmem:[#allocation8 + $0x58] sm:$0xff]
    %v707 = vld [vmem:[#allocation8 + $0x60] sm:$0xff]
    %v708 = vld [vmem:[#allocation8 + $0x68] sm:$0xff]
    %v709 = vld [vmem:[#allocation8 + $0x70] sm:$0xff]
    %v710 = vld [vmem:[#allocation8 + $0x78] sm:$0xff]
    %v711 = vld [vmem:[#allocation8 + $0x80] sm:$0xff]
    %v712 = vld [vmem:[#allocation8 + $0x88] sm:$0xff]
    %v713 = vld [vmem:[#allocation8 + $0x90] sm:$0xff]
    %v714 = vld [vmem:[#allocation8 + $0x98] sm:$0xff]
    %v715 = vld [vmem:[#allocation8 + $0xa0] sm:$0xff]
    %v716 = vld [vmem:[#allocation8 + $0xa8] sm:$0xff]
    %v717 = vld [vmem:[#allocation8 + $0xb0] sm:$0xff]
    %v718 = vld [vmem:[#allocation8 + $0xb8] sm:$0xff]
    %v719 = vld [vmem:[#allocation8 + $0xc0] sm:$0xff]
    %v720 = vld [vmem:[#allocation8 + $0xc8] sm:$0xff]
    %v721 = vld [vmem:[#allocation8 + $0xd0] sm:$0xff]
    %v722 = vld [vmem:[#allocation8 + $0xd8] sm:$0xff]
    %v723 = vld [vmem:[#allocation8 + $0xe0] sm:$0xff]
    %v724 = vld [vmem:[#allocation8 + $0xe8] sm:$0xff]
    %v725 = vld [vmem:[#allocation8 + $0xf0] sm:$0xff]
    %v726 = vld [vmem:[#allocation8 + $0xf8] sm:$0xff]
    %v727 = vld [vmem:[#allocation8 + $0x100] sm:$0xff]
    %v728 = vld [vmem:[#allocation8 + $0x108] sm:$0xff]
    %v729 = vld [vmem:[#allocation8 + $0x110] sm:$0xff]
    %v730 = vld [vmem:[#allocation8 + $0x118] sm:$0xff]
    %v731 = vld [vmem:[#allocation8 + $0x120] sm:$0xff]
    %v732 = vld [vmem:[#allocation8 + $0x128] sm:$0xff]
    %v733 = vld [vmem:[#allocation8 + $0x130] sm:$0xff]
    %v734 = vld [vmem:[#allocation8 + $0x138] sm:$0xff]
    %v735 = vld [vmem:[#allocation8 + $0x140] sm:$0xff]
    %v736 = vld [vmem:[#allocation8 + $0x148] sm:$0xff]
    %v737 = vld [vmem:[#allocation8 + $0x150] sm:$0xff]
    %v738 = vld [vmem:[#allocation8 + $0x158] sm:$0xff]
    %v739 = vld [vmem:[#allocation8 + $0x160] sm:$0xff]
    %v740 = vld [vmem:[#allocation8 + $0x168] sm:$0xff]
    %v741 = vld [vmem:[#allocation8 + $0x170] sm:$0xff]
    %v742 = vld [vmem:[#allocation8 + $0x178] sm:$0xff]
    %v743 = vld [vmem:[#allocation8 + $0x180] sm:$0xff]
    %v744 = vld [vmem:[#allocation8 + $0x188] sm:$0xff]
    %v745 = vld [vmem:[#allocation8 + $0x190] sm:$0xff]
    %v746 = vld [vmem:[#allocation8 + $0x198] sm:$0xff]
    %v747 = vld [vmem:[#allocation8 + $0x1a0] sm:$0xff]
    %v748 = vld [vmem:[#allocation8 + $0x1a8] sm:$0xff]
    %v749 = vld [vmem:[#allocation8 + $0x1b0] sm:$0xff]
    %v750 = vld [vmem:[#allocation8 + $0x1b8] sm:$0xff]
    %v751 = vld [vmem:[#allocation8 + $0x1c0] sm:$0xff]
    %v752 = vld [vmem:[#allocation8 + $0x1c8] sm:$0xff]
    %v753 = vld [vmem:[#allocation8 + $0x1d0] sm:$0xff]
    %v754 = vld [vmem:[#allocation8 + $0x1d8] sm:$0xff]
    %v755 = vld [vmem:[#allocation8 + $0x1e0] sm:$0xff]
    %v756 = vld [vmem:[#allocation8 + $0x1e8] sm:$0xff]
    %v757 = vld [vmem:[#allocation8 + $0x1f0] sm:$0xff]
    %v758 = vld [vmem:[#allocation8 + $0x1f8] sm:$0xff]
    %v759 = vld [vmem:[#allocation8 + $0x200] sm:$0xff]
    %v760 = vld [vmem:[#allocation8 + $0x208] sm:$0xff]
    %v761 = vld [vmem:[#allocation8 + $0x210] sm:$0xff]
    %v762 = vld [vmem:[#allocation8 + $0x218] sm:$0xff]
    %v763 = vld [vmem:[#allocation8 + $0x220] sm:$0xff]
    %v764 = vld [vmem:[#allocation8 + $0x228] sm:$0xff]
    %v765 = vld [vmem:[#allocation8 + $0x230] sm:$0xff]
    %v766 = vld [vmem:[#allocation8 + $0x238] sm:$0xff]
    %v767 = vld [vmem:[#allocation8 + $0x240] sm:$0xff]
    %v768 = vld [vmem:[#allocation8 + $0x248] sm:$0xff]
    %v769 = vld [vmem:[#allocation8 + $0x250] sm:$0xff]
    %v770 = vld [vmem:[#allocation8 + $0x258] sm:$0xff]
    %v771 = vld [vmem:[#allocation8 + $0x260] sm:$0xff]
    %v772 = vld [vmem:[#allocation8 + $0x268] sm:$0xff]
    %v773 = vld [vmem:[#allocation8 + $0x270] sm:$0xff]
    %v774 = vld [vmem:[#allocation8 + $0x278] sm:$0xff]
    %v775 = vld [vmem:[#allocation8 + $0x280] sm:$0xff]
    %v776 = vld [vmem:[#allocation8 + $0x288] sm:$0xff]
    %v777 = vld [vmem:[#allocation8 + $0x290] sm:$0xff]
    %v778 = vld [vmem:[#allocation8 + $0x298] sm:$0xff]
    %v779 = vld [vmem:[#allocation8 + $0x2a0] sm:$0xff]
    %v780 = vld [vmem:[#allocation8 + $0x2a8] sm:$0xff]
    %v781 = vld [vmem:[#allocation8 + $0x2b0] sm:$0xff]
    %v782 = vld [vmem:[#allocation8 + $0x2b8] sm:$0xff]
    %v783 = vld [vmem:[#allocation8 + $0x2c0] sm:$0xff]
    %v784 = vld [vmem:[#allocation8 + $0x2c8] sm:$0xff]
    %v785 = vld [vmem:[#allocation8 + $0x2d0] sm:$0xff]
    %v786 = vld [vmem:[#allocation8 + $0x2d8] sm:$0xff]
    %v787 = vld [vmem:[#allocation8 + $0x2e0] sm:$0xff]
    %v788 = vld [vmem:[#allocation8 + $0x2e8] sm:$0xff]
    %v789 = vld [vmem:[#allocation8 + $0x2f0] sm:$0xff]
    %v790 = vld [vmem:[#allocation8 + $0x2f8] sm:$0xff]
    %v791 = vld [vmem:[#allocation8 + $0x300] sm:$0xff]
    %v792 = vld [vmem:[#allocation8 + $0x308] sm:$0xff]
    %v793 = vld [vmem:[#allocation8 + $0x310] sm:$0xff]
    %v794 = vld [vmem:[#allocation8 + $0x318] sm:$0xff]
    %v795 = vld [vmem:[#allocation8 + $0x320] sm:$0xff]
    %v796 = vld [vmem:[#allocation8 + $0x328] sm:$0xff]
    %v797 = vld [vmem:[#allocation8 + $0x330] sm:$0xff]
    %v798 = vld [vmem:[#allocation8 + $0x338] sm:$0xff]
    %v799 = vld [vmem:[#allocation8 + $0x340] sm:$0xff]
    %v800 = vld [vmem:[#allocation8 + $0x348] sm:$0xff]
    %v801 = vld [vmem:[#allocation8 + $0x350] sm:$0xff]
    %v802 = vld [vmem:[#allocation8 + $0x358] sm:$0xff]
    %v803 = vld [vmem:[#allocation8 + $0x360] sm:$0xff]
    %v804 = vld [vmem:[#allocation8 + $0x368] sm:$0xff]
    %v805 = vld [vmem:[#allocation8 + $0x370] sm:$0xff]
    %v806 = vld [vmem:[#allocation8 + $0x378] sm:$0xff]
    %v807 = vld [vmem:[#allocation8 + $0x380] sm:$0xff]
    %v808 = vld [vmem:[#allocation8 + $0x388] sm:$0xff]
    %v809 = vld [vmem:[#allocation8 + $0x390] sm:$0xff]
    %v810 = vld [vmem:[#allocation8 + $0x398] sm:$0xff]
    %v811 = vld [vmem:[#allocation8 + $0x3a0] sm:$0xff]
    %v812 = vld [vmem:[#allocation8 + $0x3a8] sm:$0xff]
    %v813 = vld [vmem:[#allocation8 + $0x3b0] sm:$0xff]
    %v814 = vld [vmem:[#allocation8 + $0x3b8] sm:$0xff]
    %v815 = vld [vmem:[#allocation8 + $0x3c0] sm:$0xff]
    %v816 = vld [vmem:[#allocation8 + $0x3c8] sm:$0xff]
    %v817 = vld [vmem:[#allocation8 + $0x3d0] sm:$0xff]
    %v818 = vld [vmem:[#allocation8 + $0x3d8] sm:$0xff]
    %v819 = vld [vmem:[#allocation8 + $0x3e0] sm:$0xff]
    %v820 = vld [vmem:[#allocation8 + $0x3e8] sm:$0xff]
    %v821 = vld [vmem:[#allocation8 + $0x3f0] sm:$0xff]
    %v822 = vld [vmem:[#allocation8 + $0x3f8] sm:$0xff]
    %v823 = vld [vmem:[#allocation8 + $0x400] sm:$0xff]
    %v824 = vld [vmem:[#allocation8 + $0x408] sm:$0xff]
    %v825 = vld [vmem:[#allocation8 + $0x410] sm:$0xff]
    %v826 = vld [vmem:[#allocation8 + $0x418] sm:$0xff]
    %v827 = vld [vmem:[#allocation8 + $0x420] sm:$0xff]
    %v828 = vld [vmem:[#allocation8 + $0x428] sm:$0xff]
    %v829 = vld [vmem:[#allocation8 + $0x430] sm:$0xff]
    %v830 = vld [vmem:[#allocation8 + $0x438] sm:$0xff]
    %v831 = vld [vmem:[#allocation8 + $0x440] sm:$0xff]
    %v832 = vld [vmem:[#allocation8 + $0x448] sm:$0xff]
    %v833 = vld [vmem:[#allocation8 + $0x450] sm:$0xff]
    %v834 = vld [vmem:[#allocation8 + $0x458] sm:$0xff]
    %v835 = vld [vmem:[#allocation8 + $0x460] sm:$0xff]
    %v836 = vld [vmem:[#allocation8 + $0x468] sm:$0xff]
    %v837 = vld [vmem:[#allocation8 + $0x470] sm:$0xff]
    %v838 = vld [vmem:[#allocation8 + $0x478] sm:$0xff]
    %v839 = vld [vmem:[#allocation8 + $0x480] sm:$0xff]
    %v840 = vld [vmem:[#allocation8 + $0x488] sm:$0xff]
    %v841 = vld [vmem:[#allocation8 + $0x490] sm:$0xff]
    %v842 = vld [vmem:[#allocation8 + $0x498] sm:$0xff]
    %v843 = vld [vmem:[#allocation8 + $0x4a0] sm:$0xff]
    %v844 = vld [vmem:[#allocation8 + $0x4a8] sm:$0xff]
    %v845 = vld [vmem:[#allocation8 + $0x4b0] sm:$0xff]
    %v846 = vld [vmem:[#allocation8 + $0x4b8] sm:$0xff]
    %v847 = vld [vmem:[#allocation8 + $0x4c0] sm:$0xff]
    %v848 = vld [vmem:[#allocation8 + $0x4c8] sm:$0xff]
    %v849 = vld [vmem:[#allocation8 + $0x4d0] sm:$0xff]
    %v850 = vld [vmem:[#allocation8 + $0x4d8] sm:$0xff]
    %v851 = vld [vmem:[#allocation8 + $0x4e0] sm:$0xff]
    %v852 = vld [vmem:[#allocation8 + $0x4e8] sm:$0xff]
    %v853 = vld [vmem:[#allocation8 + $0x4f0] sm:$0xff]
    %v854 = vld [vmem:[#allocation8 + $0x4f8] sm:$0xff]
    %v855 = vld [vmem:[#allocation14 + $0x5] sm:$0xf]
    %v857 = vlaneseq
    %v858 = vshrl.u32 %v857, 7
    %v859 = vsub.s32 0, %v858
    %v860 = vrot.slane %v855, %v859
    %v861 = vlaneseq
    %v862 = vshrl.u32 %v861, 7
    %v863 = vsub.s32 1, %v862
    %v864 = vrot.slane %v855, %v863
    %v865 = vlaneseq
    %v866 = vshrl.u32 %v865, 7
    %v867 = vsub.s32 2, %v866
    %v868 = vrot.slane %v855, %v867
    %v869 = vlaneseq
    %v870 = vshrl.u32 %v869, 7
    %v871 = vsub.s32 3, %v870
    %v872 = vrot.slane %v855, %v871
    %v1037 = vunpack.c.l.b16 %v695
    %v1038 = vunpack.c.h.b16 %v695
    %v1039 = vunpack.c.l.b16 %v696
    %v1040 = vunpack.c.h.b16 %v696
    %v1041 = vunpack.c.l.b16 %v697
    %v1042 = vunpack.c.h.b16 %v697
    %v1043 = vunpack.c.l.b16 %v698
    %v1044 = vunpack.c.h.b16 %v698
    %v1045 = vunpack.c.l.b16 %v699
    %v1046 = vunpack.c.h.b16 %v699
    %v1047 = vunpack.c.l.b16 %v700
    %v1048 = vunpack.c.h.b16 %v700
    %v1049 = vunpack.c.l.b16 %v701
    %v1050 = vunpack.c.h.b16 %v701
    %v1051 = vunpack.c.l.b16 %v702
    %v1052 = vunpack.c.h.b16 %v702
    %v1053 = vunpack.c.l.b16 %v703
    %v1054 = vunpack.c.h.b16 %v703
    %v1055 = vunpack.c.l.b16 %v704
    %v1056 = vunpack.c.h.b16 %v704
    %v1057 = vunpack.c.l.b16 %v705
    %v1058 = vunpack.c.h.b16 %v705
    %v1059 = vunpack.c.l.b16 %v706
    %v1060 = vunpack.c.h.b16 %v706
    %v1061 = vunpack.c.l.b16 %v707
    %v1062 = vunpack.c.h.b16 %v707
    %v1063 = vunpack.c.l.b16 %v708
    %v1064 = vunpack.c.h.b16 %v708
    %v1065 = vunpack.c.l.b16 %v709
    %v1066 = vunpack.c.h.b16 %v709
    %v1067 = vunpack.c.l.b16 %v710
    %v1068 = vunpack.c.h.b16 %v710
    %v1069 = vunpack.c.l.b16 %v711
    %v1070 = vunpack.c.h.b16 %v711
    %v1071 = vunpack.c.l.b16 %v712
    %v1072 = vunpack.c.h.b16 %v712
    %v1073 = vunpack.c.l.b16 %v713
    %v1074 = vunpack.c.h.b16 %v713
    %v1075 = vunpack.c.l.b16 %v714
    %v1076 = vunpack.c.h.b16 %v714
    %v1077 = vunpack.c.l.b16 %v715
    %v1078 = vunpack.c.h.b16 %v715
    %v1079 = vunpack.c.l.b16 %v716
    %v1080 = vunpack.c.h.b16 %v716
    %v1081 = vunpack.c.l.b16 %v717
    %v1082 = vunpack.c.h.b16 %v717
    %v1083 = vunpack.c.l.b16 %v718
    %v1084 = vunpack.c.h.b16 %v718
    %v1085 = vunpack.c.l.b16 %v719
    %v1086 = vunpack.c.h.b16 %v719
    %v1087 = vunpack.c.l.b16 %v720
    %v1088 = vunpack.c.h.b16 %v720
    %v1089 = vunpack.c.l.b16 %v721
    %v1090 = vunpack.c.h.b16 %v721
    %v1091 = vunpack.c.l.b16 %v722
    %v1092 = vunpack.c.h.b16 %v722
    %v1093 = vunpack.c.l.b16 %v723
    %v1094 = vunpack.c.h.b16 %v723
    %v1095 = vunpack.c.l.b16 %v724
    %v1096 = vunpack.c.h.b16 %v724
    %v1097 = vunpack.c.l.b16 %v725
    %v1098 = vunpack.c.h.b16 %v725
    %v1099 = vunpack.c.l.b16 %v726
    %v1100 = vunpack.c.h.b16 %v726
    %v1101 = vunpack.c.l.b16 %v727
    %v1102 = vunpack.c.h.b16 %v727
    %v1103 = vunpack.c.l.b16 %v728
    %v1104 = vunpack.c.h.b16 %v728
    %v1105 = vunpack.c.l.b16 %v729
    %v1106 = vunpack.c.h.b16 %v729
    %v1107 = vunpack.c.l.b16 %v730
    %v1108 = vunpack.c.h.b16 %v730
    %v1109 = vunpack.c.l.b16 %v731
    %v1110 = vunpack.c.h.b16 %v731
    %v1111 = vunpack.c.l.b16 %v732
    %v1112 = vunpack.c.h.b16 %v732
    %v1113 = vunpack.c.l.b16 %v733
    %v1114 = vunpack.c.h.b16 %v733
    %v1115 = vunpack.c.l.b16 %v734
    %v1116 = vunpack.c.h.b16 %v734
    %v1117 = vunpack.c.l.b16 %v735
    %v1118 = vunpack.c.h.b16 %v735
    %v1119 = vunpack.c.l.b16 %v736
    %v1120 = vunpack.c.h.b16 %v736
    %v1121 = vunpack.c.l.b16 %v737
    %v1122 = vunpack.c.h.b16 %v737
    %v1123 = vunpack.c.l.b16 %v738
    %v1124 = vunpack.c.h.b16 %v738
    %v1125 = vunpack.c.l.b16 %v739
    %v1126 = vunpack.c.h.b16 %v739
    %v1127 = vunpack.c.l.b16 %v740
    %v1128 = vunpack.c.h.b16 %v740
    %v1129 = vunpack.c.l.b16 %v741
    %v1130 = vunpack.c.h.b16 %v741
    %v1131 = vunpack.c.l.b16 %v742
    %v1132 = vunpack.c.h.b16 %v742
    %v1133 = vunpack.c.l.b16 %v743
    %v1134 = vunpack.c.h.b16 %v743
    %v1135 = vunpack.c.l.b16 %v744
    %v1136 = vunpack.c.h.b16 %v744
    %v1137 = vunpack.c.l.b16 %v745
    %v1138 = vunpack.c.h.b16 %v745
    %v1139 = vunpack.c.l.b16 %v746
    %v1140 = vunpack.c.h.b16 %v746
    %v1141 = vunpack.c.l.b16 %v747
    %v1142 = vunpack.c.h.b16 %v747
    %v1143 = vunpack.c.l.b16 %v748
    %v1144 = vunpack.c.h.b16 %v748
    %v1145 = vunpack.c.l.b16 %v749
    %v1146 = vunpack.c.h.b16 %v749
    %v1147 = vunpack.c.l.b16 %v750
    %v1148 = vunpack.c.h.b16 %v750
    %v1149 = vunpack.c.l.b16 %v751
    %v1150 = vunpack.c.h.b16 %v751
    %v1151 = vunpack.c.l.b16 %v752
    %v1152 = vunpack.c.h.b16 %v752
    %v1153 = vunpack.c.l.b16 %v753
    %v1154 = vunpack.c.h.b16 %v753
    %v1155 = vunpack.c.l.b16 %v754
    %v1156 = vunpack.c.h.b16 %v754
    %v1157 = vunpack.c.l.b16 %v755
    %v1158 = vunpack.c.h.b16 %v755
    %v1159 = vunpack.c.l.b16 %v756
    %v1160 = vunpack.c.h.b16 %v756
    %v1161 = vunpack.c.l.b16 %v757
    %v1162 = vunpack.c.h.b16 %v757
    %v1163 = vunpack.c.l.b16 %v758
    %v1164 = vunpack.c.h.b16 %v758
    %v1165 = vunpack.c.l.b16 %v759
    %v1166 = vunpack.c.h.b16 %v759
    %v1167 = vunpack.c.l.b16 %v760
    %v1168 = vunpack.c.h.b16 %v760
    %v1169 = vunpack.c.l.b16 %v761
    %v1170 = vunpack.c.h.b16 %v761
    %v1171 = vunpack.c.l.b16 %v762
    %v1172 = vunpack.c.h.b16 %v762
    %v1173 = vunpack.c.l.b16 %v763
    %v1174 = vunpack.c.h.b16 %v763
    %v1175 = vunpack.c.l.b16 %v764
    %v1176 = vunpack.c.h.b16 %v764
    %v1177 = vunpack.c.l.b16 %v765
    %v1178 = vunpack.c.h.b16 %v765
    %v1179 = vunpack.c.l.b16 %v766
    %v1180 = vunpack.c.h.b16 %v766
    %v1181 = vunpack.c.l.b16 %v767
    %v1182 = vunpack.c.h.b16 %v767
    %v1183 = vunpack.c.l.b16 %v768
    %v1184 = vunpack.c.h.b16 %v768
    %v1185 = vunpack.c.l.b16 %v769
    %v1186 = vunpack.c.h.b16 %v769
    %v1187 = vunpack.c.l.b16 %v770
    %v1188 = vunpack.c.h.b16 %v770
    %v1189 = vunpack.c.l.b16 %v771
    %v1190 = vunpack.c.h.b16 %v771
    %v1191 = vunpack.c.l.b16 %v772
    %v1192 = vunpack.c.h.b16 %v772
    %v1193 = vunpack.c.l.b16 %v773
    %v1194 = vunpack.c.h.b16 %v773
    %v1195 = vunpack.c.l.b16 %v774
    %v1196 = vunpack.c.h.b16 %v774
    %v1197 = vunpack.c.l.b16 %v775
    %v1198 = vunpack.c.h.b16 %v775
    %v1199 = vunpack.c.l.b16 %v776
    %v1200 = vunpack.c.h.b16 %v776
    %v1201 = vunpack.c.l.b16 %v777
    %v1202 = vunpack.c.h.b16 %v777
    %v1203 = vunpack.c.l.b16 %v778
    %v1204 = vunpack.c.h.b16 %v778
    %v1205 = vunpack.c.l.b16 %v779
    %v1206 = vunpack.c.h.b16 %v779
    %v1207 = vunpack.c.l.b16 %v780
    %v1208 = vunpack.c.h.b16 %v780
    %v1209 = vunpack.c.l.b16 %v781
    %v1210 = vunpack.c.h.b16 %v781
    %v1211 = vunpack.c.l.b16 %v782
    %v1212 = vunpack.c.h.b16 %v782
    %v1213 = vunpack.c.l.b16 %v783
    %v1214 = vunpack.c.h.b16 %v783
    %v1215 = vunpack.c.l.b16 %v784
    %v1216 = vunpack.c.h.b16 %v784
    %v1217 = vunpack.c.l.b16 %v785
    %v1218 = vunpack.c.h.b16 %v785
    %v1219 = vunpack.c.l.b16 %v786
    %v1220 = vunpack.c.h.b16 %v786
    %v1221 = vunpack.c.l.b16 %v787
    %v1222 = vunpack.c.h.b16 %v787
    %v1223 = vunpack.c.l.b16 %v788
    %v1224 = vunpack.c.h.b16 %v788
    %v1225 = vunpack.c.l.b16 %v789
    %v1226 = vunpack.c.h.b16 %v789
    %v1227 = vunpack.c.l.b16 %v790
    %v1228 = vunpack.c.h.b16 %v790
    %v1229 = vunpack.c.l.b16 %v791
    %v1230 = vunpack.c.h.b16 %v791
    %v1231 = vunpack.c.l.b16 %v792
    %v1232 = vunpack.c.h.b16 %v792
    %v1233 = vunpack.c.l.b16 %v793
    %v1234 = vunpack.c.h.b16 %v793
    %v1235 = vunpack.c.l.b16 %v794
    %v1236 = vunpack.c.h.b16 %v794
    %v1237 = vunpack.c.l.b16 %v795
    %v1238 = vunpack.c.h.b16 %v795
    %v1239 = vunpack.c.l.b16 %v796
    %v1240 = vunpack.c.h.b16 %v796
    %v1241 = vunpack.c.l.b16 %v797
    %v1242 = vunpack.c.h.b16 %v797
    %v1243 = vunpack.c.l.b16 %v798
    %v1244 = vunpack.c.h.b16 %v798
    %v1245 = vunpack.c.l.b16 %v799
    %v1246 = vunpack.c.h.b16 %v799
    %v1247 = vunpack.c.l.b16 %v800
    %v1248 = vunpack.c.h.b16 %v800
    %v1249 = vunpack.c.l.b16 %v801
    %v1250 = vunpack.c.h.b16 %v801
    %v1251 = vunpack.c.l.b16 %v802
    %v1252 = vunpack.c.h.b16 %v802
    %v1253 = vunpack.c.l.b16 %v803
    %v1254 = vunpack.c.h.b16 %v803
    %v1255 = vunpack.c.l.b16 %v804
    %v1256 = vunpack.c.h.b16 %v804
    %v1257 = vunpack.c.l.b16 %v805
    %v1258 = vunpack.c.h.b16 %v805
    %v1259 = vunpack.c.l.b16 %v806
    %v1260 = vunpack.c.h.b16 %v806
    %v1261 = vunpack.c.l.b16 %v807
    %v1262 = vunpack.c.h.b16 %v807
    %v1263 = vunpack.c.l.b16 %v808
    %v1264 = vunpack.c.h.b16 %v808
    %v1265 = vunpack.c.l.b16 %v809
    %v1266 = vunpack.c.h.b16 %v809
    %v1267 = vunpack.c.l.b16 %v810
    %v1268 = vunpack.c.h.b16 %v810
    %v1269 = vunpack.c.l.b16 %v811
    %v1270 = vunpack.c.h.b16 %v811
    %v1271 = vunpack.c.l.b16 %v812
    %v1272 = vunpack.c.h.b16 %v812
    %v1273 = vunpack.c.l.b16 %v813
    %v1274 = vunpack.c.h.b16 %v813
    %v1275 = vunpack.c.l.b16 %v814
    %v1276 = vunpack.c.h.b16 %v814
    %v1277 = vunpack.c.l.b16 %v815
    %v1278 = vunpack.c.h.b16 %v815
    %v1279 = vunpack.c.l.b16 %v816
    %v1280 = vunpack.c.h.b16 %v816
    %v1281 = vunpack.c.l.b16 %v817
    %v1282 = vunpack.c.h.b16 %v817
    %v1283 = vunpack.c.l.b16 %v818
    %v1284 = vunpack.c.h.b16 %v818
    %v1285 = vunpack.c.l.b16 %v819
    %v1286 = vunpack.c.h.b16 %v819
    %v1287 = vunpack.c.l.b16 %v820
    %v1288 = vunpack.c.h.b16 %v820
    %v1289 = vunpack.c.l.b16 %v821
    %v1290 = vunpack.c.h.b16 %v821
    %v1291 = vunpack.c.l.b16 %v822
    %v1292 = vunpack.c.h.b16 %v822
    %v1293 = vunpack.c.l.b16 %v823
    %v1294 = vunpack.c.h.b16 %v823
    %v1295 = vunpack.c.l.b16 %v824
    %v1296 = vunpack.c.h.b16 %v824
    %v1297 = vunpack.c.l.b16 %v825
    %v1298 = vunpack.c.h.b16 %v825
    %v1299 = vunpack.c.l.b16 %v826
    %v1300 = vunpack.c.h.b16 %v826
    %v1301 = vunpack.c.l.b16 %v827
    %v1302 = vunpack.c.h.b16 %v827
    %v1303 = vunpack.c.l.b16 %v828
    %v1304 = vunpack.c.h.b16 %v828
    %v1305 = vunpack.c.l.b16 %v829
    %v1306 = vunpack.c.h.b16 %v829
    %v1307 = vunpack.c.l.b16 %v830
    %v1308 = vunpack.c.h.b16 %v830
    %v1309 = vunpack.c.l.b16 %v831
    %v1310 = vunpack.c.h.b16 %v831
    %v1311 = vunpack.c.l.b16 %v832
    %v1312 = vunpack.c.h.b16 %v832
    %v1313 = vunpack.c.l.b16 %v833
    %v1314 = vunpack.c.h.b16 %v833
    %v1315 = vunpack.c.l.b16 %v834
    %v1316 = vunpack.c.h.b16 %v834
    %v1317 = vunpack.c.l.b16 %v835
    %v1318 = vunpack.c.h.b16 %v835
    %v1319 = vunpack.c.l.b16 %v836
    %v1320 = vunpack.c.h.b16 %v836
    %v1321 = vunpack.c.l.b16 %v837
    %v1322 = vunpack.c.h.b16 %v837
    %v1323 = vunpack.c.l.b16 %v838
    %v1324 = vunpack.c.h.b16 %v838
    %v1325 = vunpack.c.l.b16 %v839
    %v1326 = vunpack.c.h.b16 %v839
    %v1327 = vunpack.c.l.b16 %v840
    %v1328 = vunpack.c.h.b16 %v840
    %v1329 = vunpack.c.l.b16 %v841
    %v1330 = vunpack.c.h.b16 %v841
    %v1331 = vunpack.c.l.b16 %v842
    %v1332 = vunpack.c.h.b16 %v842
    %v1333 = vunpack.c.l.b16 %v843
    %v1334 = vunpack.c.h.b16 %v843
    %v1335 = vunpack.c.l.b16 %v844
    %v1336 = vunpack.c.h.b16 %v844
    %v1337 = vunpack.c.l.b16 %v845
    %v1338 = vunpack.c.h.b16 %v845
    %v1339 = vunpack.c.l.b16 %v846
    %v1340 = vunpack.c.h.b16 %v846
    %v1341 = vunpack.c.l.b16 %v847
    %v1342 = vunpack.c.h.b16 %v847
    %v1343 = vunpack.c.l.b16 %v848
    %v1344 = vunpack.c.h.b16 %v848
    %v1345 = vunpack.c.l.b16 %v849
    %v1346 = vunpack.c.h.b16 %v849
    %v1347 = vunpack.c.l.b16 %v850
    %v1348 = vunpack.c.h.b16 %v850
    %v1349 = vunpack.c.l.b16 %v851
    %v1350 = vunpack.c.h.b16 %v851
    %v1351 = vunpack.c.l.b16 %v852
    %v1352 = vunpack.c.h.b16 %v852
    %v1353 = vunpack.c.l.b16 %v853
    %v1354 = vunpack.c.h.b16 %v853
    %v1355 = vunpack.c.l.b16 %v854
    %v1356 = vunpack.c.h.b16 %v854
    %v1357 = vpack.c.b16 %v1041, %v1037
    %v1358 = vpack.c.b16 %v1042, %v1038
    %v1359 = vpack.c.b16 %v1043, %v1039
    %v1360 = vpack.c.b16 %v1044, %v1040
    %v1361 = vpack.c.b16 %v1049, %v1045
    %v1362 = vpack.c.b16 %v1050, %v1046
    %v1363 = vpack.c.b16 %v1051, %v1047
    %v1364 = vpack.c.b16 %v1052, %v1048
    %v1365 = vpack.c.b16 %v1057, %v1053
    %v1366 = vpack.c.b16 %v1058, %v1054
    %v1367 = vpack.c.b16 %v1059, %v1055
    %v1368 = vpack.c.b16 %v1060, %v1056
    %v1369 = vpack.c.b16 %v1065, %v1061
    %v1370 = vpack.c.b16 %v1066, %v1062
    %v1371 = vpack.c.b16 %v1067, %v1063
    %v1372 = vpack.c.b16 %v1068, %v1064
    %v1373 = vpack.c.b16 %v1073, %v1069
    %v1374 = vpack.c.b16 %v1074, %v1070
    %v1375 = vpack.c.b16 %v1075, %v1071
    %v1376 = vpack.c.b16 %v1076, %v1072
    %v1377 = vpack.c.b16 %v1081, %v1077
    %v1378 = vpack.c.b16 %v1082, %v1078
    %v1379 = vpack.c.b16 %v1083, %v1079
    %v1380 = vpack.c.b16 %v1084, %v1080
    %v1381 = vpack.c.b16 %v1089, %v1085
    %v1382 = vpack.c.b16 %v1090, %v1086
    %v1383 = vpack.c.b16 %v1091, %v1087
    %v1384 = vpack.c.b16 %v1092, %v1088
    %v1385 = vpack.c.b16 %v1097, %v1093
    %v1386 = vpack.c.b16 %v1098, %v1094
    %v1387 = vpack.c.b16 %v1099, %v1095
    %v1388 = vpack.c.b16 %v1100, %v1096
    %v1389 = vpack.c.b16 %v1105, %v1101
    %v1390 = vpack.c.b16 %v1106, %v1102
    %v1391 = vpack.c.b16 %v1107, %v1103
    %v1392 = vpack.c.b16 %v1108, %v1104
    %v1393 = vpack.c.b16 %v1113, %v1109
    %v1394 = vpack.c.b16 %v1114, %v1110
    %v1395 = vpack.c.b16 %v1115, %v1111
    %v1396 = vpack.c.b16 %v1116, %v1112
    %v1397 = vpack.c.b16 %v1121, %v1117
    %v1398 = vpack.c.b16 %v1122, %v1118
    %v1399 = vpack.c.b16 %v1123, %v1119
    %v1400 = vpack.c.b16 %v1124, %v1120
    %v1401 = vpack.c.b16 %v1129, %v1125
    %v1402 = vpack.c.b16 %v1130, %v1126
    %v1403 = vpack.c.b16 %v1131, %v1127
    %v1404 = vpack.c.b16 %v1132, %v1128
    %v1405 = vpack.c.b16 %v1137, %v1133
    %v1406 = vpack.c.b16 %v1138, %v1134
    %v1407 = vpack.c.b16 %v1139, %v1135
    %v1408 = vpack.c.b16 %v1140, %v1136
    %v1409 = vpack.c.b16 %v1145, %v1141
    %v1410 = vpack.c.b16 %v1146, %v1142
    %v1411 = vpack.c.b16 %v1147, %v1143
    %v1412 = vpack.c.b16 %v1148, %v1144
    %v1413 = vpack.c.b16 %v1153, %v1149
    %v1414 = vpack.c.b16 %v1154, %v1150
    %v1415 = vpack.c.b16 %v1155, %v1151
    %v1416 = vpack.c.b16 %v1156, %v1152
    %v1417 = vpack.c.b16 %v1161, %v1157
    %v1418 = vpack.c.b16 %v1162, %v1158
    %v1419 = vpack.c.b16 %v1163, %v1159
    %v1420 = vpack.c.b16 %v1164, %v1160
    %v1421 = vpack.c.b16 %v1169, %v1165
    %v1422 = vpack.c.b16 %v1170, %v1166
    %v1423 = vpack.c.b16 %v1171, %v1167
    %v1424 = vpack.c.b16 %v1172, %v1168
    %v1425 = vpack.c.b16 %v1177, %v1173
    %v1426 = vpack.c.b16 %v1178, %v1174
    %v1427 = vpack.c.b16 %v1179, %v1175
    %v1428 = vpack.c.b16 %v1180, %v1176
    %v1429 = vpack.c.b16 %v1185, %v1181
    %v1430 = vpack.c.b16 %v1186, %v1182
    %v1431 = vpack.c.b16 %v1187, %v1183
    %v1432 = vpack.c.b16 %v1188, %v1184
    %v1433 = vpack.c.b16 %v1193, %v1189
    %v1434 = vpack.c.b16 %v1194, %v1190
    %v1435 = vpack.c.b16 %v1195, %v1191
    %v1436 = vpack.c.b16 %v1196, %v1192
    %v1437 = vpack.c.b16 %v1201, %v1197
    %v1438 = vpack.c.b16 %v1202, %v1198
    %v1439 = vpack.c.b16 %v1203, %v1199
    %v1440 = vpack.c.b16 %v1204, %v1200
    %v1441 = vpack.c.b16 %v1209, %v1205
    %v1442 = vpack.c.b16 %v1210, %v1206
    %v1443 = vpack.c.b16 %v1211, %v1207
    %v1444 = vpack.c.b16 %v1212, %v1208
    %v1445 = vpack.c.b16 %v1217, %v1213
    %v1446 = vpack.c.b16 %v1218, %v1214
    %v1447 = vpack.c.b16 %v1219, %v1215
    %v1448 = vpack.c.b16 %v1220, %v1216
    %v1449 = vpack.c.b16 %v1225, %v1221
    %v1450 = vpack.c.b16 %v1226, %v1222
    %v1451 = vpack.c.b16 %v1227, %v1223
    %v1452 = vpack.c.b16 %v1228, %v1224
    %v1453 = vpack.c.b16 %v1233, %v1229
    %v1454 = vpack.c.b16 %v1234, %v1230
    %v1455 = vpack.c.b16 %v1235, %v1231
    %v1456 = vpack.c.b16 %v1236, %v1232
    %v1457 = vpack.c.b16 %v1241, %v1237
    %v1458 = vpack.c.b16 %v1242, %v1238
    %v1459 = vpack.c.b16 %v1243, %v1239
    %v1460 = vpack.c.b16 %v1244, %v1240
    %v1461 = vpack.c.b16 %v1249, %v1245
    %v1462 = vpack.c.b16 %v1250, %v1246
    %v1463 = vpack.c.b16 %v1251, %v1247
    %v1464 = vpack.c.b16 %v1252, %v1248
    %v1465 = vpack.c.b16 %v1257, %v1253
    %v1466 = vpack.c.b16 %v1258, %v1254
    %v1467 = vpack.c.b16 %v1259, %v1255
    %v1468 = vpack.c.b16 %v1260, %v1256
    %v1469 = vpack.c.b16 %v1265, %v1261
    %v1470 = vpack.c.b16 %v1266, %v1262
    %v1471 = vpack.c.b16 %v1267, %v1263
    %v1472 = vpack.c.b16 %v1268, %v1264
    %v1473 = vpack.c.b16 %v1273, %v1269
    %v1474 = vpack.c.b16 %v1274, %v1270
    %v1475 = vpack.c.b16 %v1275, %v1271
    %v1476 = vpack.c.b16 %v1276, %v1272
    %v1477 = vpack.c.b16 %v1281, %v1277
    %v1478 = vpack.c.b16 %v1282, %v1278
    %v1479 = vpack.c.b16 %v1283, %v1279
    %v1480 = vpack.c.b16 %v1284, %v1280
    %v1481 = vpack.c.b16 %v1289, %v1285
    %v1482 = vpack.c.b16 %v1290, %v1286
    %v1483 = vpack.c.b16 %v1291, %v1287
    %v1484 = vpack.c.b16 %v1292, %v1288
    %v1485 = vpack.c.b16 %v1297, %v1293
    %v1486 = vpack.c.b16 %v1298, %v1294
    %v1487 = vpack.c.b16 %v1299, %v1295
    %v1488 = vpack.c.b16 %v1300, %v1296
    %v1489 = vpack.c.b16 %v1305, %v1301
    %v1490 = vpack.c.b16 %v1306, %v1302
    %v1491 = vpack.c.b16 %v1307, %v1303
    %v1492 = vpack.c.b16 %v1308, %v1304
    %v1493 = vpack.c.b16 %v1313, %v1309
    %v1494 = vpack.c.b16 %v1314, %v1310
    %v1495 = vpack.c.b16 %v1315, %v1311
    %v1496 = vpack.c.b16 %v1316, %v1312
    %v1497 = vpack.c.b16 %v1321, %v1317
    %v1498 = vpack.c.b16 %v1322, %v1318
    %v1499 = vpack.c.b16 %v1323, %v1319
    %v1500 = vpack.c.b16 %v1324, %v1320
    %v1501 = vpack.c.b16 %v1329, %v1325
    %v1502 = vpack.c.b16 %v1330, %v1326
    %v1503 = vpack.c.b16 %v1331, %v1327
    %v1504 = vpack.c.b16 %v1332, %v1328
    %v1505 = vpack.c.b16 %v1337, %v1333
    %v1506 = vpack.c.b16 %v1338, %v1334
    %v1507 = vpack.c.b16 %v1339, %v1335
    %v1508 = vpack.c.b16 %v1340, %v1336
    %v1509 = vpack.c.b16 %v1345, %v1341
    %v1510 = vpack.c.b16 %v1346, %v1342
    %v1511 = vpack.c.b16 %v1347, %v1343
    %v1512 = vpack.c.b16 %v1348, %v1344
    %v1513 = vpack.c.b16 %v1353, %v1349
    %v1514 = vpack.c.b16 %v1354, %v1350
    %v1515 = vpack.c.b16 %v1355, %v1351
    %v1516 = vpack.c.b16 %v1356, %v1352
    %1677 = vmatprep.subr.bf16.mxu0 %v1386
    %1678 = vmatpush1.bf16.msra.mxu0 %v1385
    %1679 = vmatprep.subr.bf16.mxu0 %v1382
    %1680 = vmatpush1.bf16.msra.mxu0 %v1381
    %1681 = vmatprep.subr.bf16.mxu0 %v1378
    %1682 = vmatpush1.bf16.msra.mxu0 %v1377
    %1683 = vmatprep.subr.bf16.mxu0 %v1374
    %1684 = vmatpush1.bf16.msra.mxu0 %v1373
    %1685 = vmatprep.subr.bf16.mxu0 %v1370
    %1686 = vmatpush1.bf16.msra.mxu0 %v1369
    %1687 = vmatprep.subr.bf16.mxu0 %v1366
    %1688 = vmatpush1.bf16.msra.mxu0 %v1365
    %1689 = vmatprep.subr.bf16.mxu0 %v1362
    %1690 = vmatpush1.bf16.msra.mxu0 %v1361
    %1691 = vmatprep.subr.bf16.mxu0 %v1358
    %1692 = vmatpush1.bf16.msra.mxu0 %v1357
    %1693 = vmatprep.subr.bf16.mxu0 %v1418
    %1694 = vmatpush2.bf16.msra.mxu0 %v1417
    %1695 = vmatprep.subr.bf16.mxu0 %v1414
    %1696 = vmatpush2.bf16.msra.mxu0 %v1413
    %1697 = vmatprep.subr.bf16.mxu0 %v1410
    %1698 = vmatpush2.bf16.msra.mxu0 %v1409
    %1699 = vmatprep.subr.bf16.mxu0 %v1406
    %1700 = vmatpush2.bf16.msra.mxu0 %v1405
    %1701 = vmatprep.subr.bf16.mxu0 %v1402
    %1702 = vmatpush2.bf16.msra.mxu0 %v1401
    %1703 = vmatprep.subr.bf16.mxu0 %v1398
    %1704 = vmatpush2.bf16.msra.mxu0 %v1397
    %1705 = vmatprep.subr.bf16.mxu0 %v1394
    %1706 = vmatpush2.bf16.msra.mxu0 %v1393
    %1707 = vmatprep.subr.bf16.mxu0 %v1390
    %1708 = vmatpush2.bf16.msra.mxu0 %v1389
    %1709 = vmatprep.mubr.bf16.mxu0 %v691
    %1710 = vmatmul.mubr.bf16.gmra.mxu0 %v690
    %v1711 = vpop.f32.mrf.mxu0
    %v1712 = vadd.f32 %v860, %v1711
    %v1713 = vpop.f32.mrf.mxu0
    %v1714 = vadd.f32 %v864, %v1713
    %v1715 = vpop.f32.mrf.mxu0
    %v1716 = vpop.f32.mrf.mxu0
    %1717 = vdwg.mxu0
    %1718 = vmatprep.subr.bf16.mxu0 %v1450
    %1719 = vmatpush1.bf16.msra.mxu0 %v1449
    %1720 = vmatprep.subr.bf16.mxu0 %v1446
    %1721 = vmatpush1.bf16.msra.mxu0 %v1445
    %1722 = vmatprep.subr.bf16.mxu0 %v1442
    %1723 = vmatpush1.bf16.msra.mxu0 %v1441
    %1724 = vmatprep.subr.bf16.mxu0 %v1438
    %1725 = vmatpush1.bf16.msra.mxu0 %v1437
    %1726 = vmatprep.subr.bf16.mxu0 %v1434
    %1727 = vmatpush1.bf16.msra.mxu0 %v1433
    %1728 = vmatprep.subr.bf16.mxu0 %v1430
    %1729 = vmatpush1.bf16.msra.mxu0 %v1429
    %1730 = vmatprep.subr.bf16.mxu0 %v1426
    %1731 = vmatpush1.bf16.msra.mxu0 %v1425
    %1732 = vmatprep.subr.bf16.mxu0 %v1422
    %1733 = vmatpush1.bf16.msra.mxu0 %v1421
    %1734 = vmatprep.subr.bf16.mxu0 %v1482
    %1735 = vmatpush2.bf16.msra.mxu0 %v1481
    %1736 = vmatprep.subr.bf16.mxu0 %v1478
    %1737 = vmatpush2.bf16.msra.mxu0 %v1477
    %1738 = vmatprep.subr.bf16.mxu0 %v1474
    %1739 = vmatpush2.bf16.msra.mxu0 %v1473
    %1740 = vmatprep.subr.bf16.mxu0 %v1470
    %1741 = vmatpush2.bf16.msra.mxu0 %v1469
    %1742 = vmatprep.subr.bf16.mxu0 %v1466
    %1743 = vmatpush2.bf16.msra.mxu0 %v1465
    %1744 = vmatprep.subr.bf16.mxu0 %v1462
    %1745 = vmatpush2.bf16.msra.mxu0 %v1461
    %1746 = vmatprep.subr.bf16.mxu0 %v1458
    %1747 = vmatpush2.bf16.msra.mxu0 %v1457
    %1748 = vmatprep.subr.bf16.mxu0 %v1454
    %1749 = vmatpush2.bf16.msra.mxu0 %v1453
    %1750 = vmatprep.mubr.bf16.mxu0 %v693
    %1751 = vmatmul.mubr.bf16.gmra.mxu0 %v692
    %v1752 = vpop.f32.mrf.mxu0
    %v1753 = vadd.f32 %v1712, %v1752
    %v1754 = vpop.f32.mrf.mxu0
    %v1755 = vadd.f32 %v1714, %v1754
    %v1756 = vpop.f32.mrf.mxu0
    %v1757 = vpop.f32.mrf.mxu0
    %1758 = vdwg.mxu0
    %1759 = vmatprep.subr.bf16.mxu0 %v1514
    %1760 = vmatpush1.bf16.msra.mxu0 %v1513
    %1761 = vmatprep.subr.bf16.mxu0 %v1510
    %1762 = vmatpush1.bf16.msra.mxu0 %v1509
    %1763 = vmatprep.subr.bf16.mxu0 %v1506
    %1764 = vmatpush1.bf16.msra.mxu0 %v1505
    %1765 = vmatprep.subr.bf16.mxu0 %v1502
    %1766 = vmatpush1.bf16.msra.mxu0 %v1501
    %1767 = vmatprep.subr.bf16.mxu0 %v1498
    %1768 = vmatpush1.bf16.msra.mxu0 %v1497
    %1769 = vmatprep.subr.bf16.mxu0 %v1494
    %1770 = vmatpush1.bf16.msra.mxu0 %v1493
    %1771 = vmatprep.subr.bf16.mxu0 %v1490
    %1772 = vmatpush1.bf16.msra.mxu0 %v1489
    %1773 = vmatprep.subr.bf16.mxu0 %v1486
    %1774 = vmatpush1.bf16.msra.mxu0 %v1485
    %1775 = vmatprep.subr.bf16.mxu0 0
    %1776 = vmatpush2.bf16.msra.mxu0 0
    %1777 = vmatprep.subr.bf16.mxu0 0
    %1778 = vmatpush2.bf16.msra.mxu0 0
    %1779 = vmatprep.subr.bf16.mxu0 0
    %1780 = vmatpush2.bf16.msra.mxu0 0
    %1781 = vmatprep.subr.bf16.mxu0 0
    %1782 = vmatpush2.bf16.msra.mxu0 0
    %1783 = vmatprep.subr.bf16.mxu0 0
    %1784 = vmatpush2.bf16.msra.mxu0 0
    %1785 = vmatprep.subr.bf16.mxu0 0
    %1786 = vmatpush2.bf16.msra.mxu0 0
    %1787 = vmatprep.subr.bf16.mxu0 0
    %1788 = vmatpush2.bf16.msra.mxu0 0
    %1789 = vmatprep.subr.bf16.mxu0 0
    %1790 = vmatpush2.bf16.msra.mxu0 0
    %1791 = vmatprep.mubr.bf16.mxu0 0
    %1792 = vmatmul.mubr.bf16.gmra.mxu0 %v694
    %v1793 = vpop.f32.mrf.mxu0
    %v1794 = vadd.f32 %v1753, %v1793
    %v1795 = vpop.f32.mrf.mxu0
    %v1796 = vadd.f32 %v1755, %v1795
    %v1797 = vpop.f32.mrf.mxu0
    %v1798 = vpop.f32.mrf.mxu0
    %1799 = vdwg.mxu0
    %1800 = vmatprep.subr.bf16.mxu0 %v1388
    %1801 = vmatpush1.bf16.msra.mxu0 %v1387
    %1802 = vmatprep.subr.bf16.mxu0 %v1384
    %1803 = vmatpush1.bf16.msra.mxu0 %v1383
    %1804 = vmatprep.subr.bf16.mxu0 %v1380
    %1805 = vmatpush1.bf16.msra.mxu0 %v1379
    %1806 = vmatprep.subr.bf16.mxu0 %v1376
    %1807 = vmatpush1.bf16.msra.mxu0 %v1375
    %1808 = vmatprep.subr.bf16.mxu0 %v1372
    %1809 = vmatpush1.bf16.msra.mxu0 %v1371
    %1810 = vmatprep.subr.bf16.mxu0 %v1368
    %1811 = vmatpush1.bf16.msra.mxu0 %v1367
    %1812 = vmatprep.subr.bf16.mxu0 %v1364
    %1813 = vmatpush1.bf16.msra.mxu0 %v1363
    %1814 = vmatprep.subr.bf16.mxu0 %v1360
    %1815 = vmatpush1.bf16.msra.mxu0 %v1359
    %1816 = vmatprep.subr.bf16.mxu0 %v1420
    %1817 = vmatpush2.bf16.msra.mxu0 %v1419
    %1818 = vmatprep.subr.bf16.mxu0 %v1416
    %1819 = vmatpush2.bf16.msra.mxu0 %v1415
    %1820 = vmatprep.subr.bf16.mxu0 %v1412
    %1821 = vmatpush2.bf16.msra.mxu0 %v1411
    %1822 = vmatprep.subr.bf16.mxu0 %v1408
    %1823 = vmatpush2.bf16.msra.mxu0 %v1407
    %1824 = vmatprep.subr.bf16.mxu0 %v1404
    %1825 = vmatpush2.bf16.msra.mxu0 %v1403
    %1826 = vmatprep.subr.bf16.mxu0 %v1400
    %1827 = vmatpush2.bf16.msra.mxu0 %v1399
    %1828 = vmatprep.subr.bf16.mxu0 %v1396
    %1829 = vmatpush2.bf16.msra.mxu0 %v1395
    %1830 = vmatprep.subr.bf16.mxu0 %v1392
    %1831 = vmatpush2.bf16.msra.mxu0 %v1391
    %1832 = vmatprep.mubr.bf16.mxu0 %v691
    %1833 = vmatmul.mubr.bf16.gmra.mxu0 %v690
    %v1834 = vpop.f32.mrf.mxu0
    %v1835 = vadd.f32 %v868, %v1834
    %v1836 = vpop.f32.mrf.mxu0
    %v1837 = vadd.f32 %v872, %v1836
    %v1838 = vpop.f32.mrf.mxu0
    %v1839 = vpop.f32.mrf.mxu0
    %1840 = vdwg.mxu0
    %1841 = vmatprep.subr.bf16.mxu0 %v1452
    %1842 = vmatpush1.bf16.msra.mxu0 %v1451
    %1843 = vmatprep.subr.bf16.mxu0 %v1448
    %1844 = vmatpush1.bf16.msra.mxu0 %v1447
    %1845 = vmatprep.subr.bf16.mxu0 %v1444
    %1846 = vmatpush1.bf16.msra.mxu0 %v1443
    %1847 = vmatprep.subr.bf16.mxu0 %v1440
    %1848 = vmatpush1.bf16.msra.mxu0 %v1439
    %1849 = vmatprep.subr.bf16.mxu0 %v1436
    %1850 = vmatpush1.bf16.msra.mxu0 %v1435
    %1851 = vmatprep.subr.bf16.mxu0 %v1432
    %1852 = vmatpush1.bf16.msra.mxu0 %v1431
    %1853 = vmatprep.subr.bf16.mxu0 %v1428
    %1854 = vmatpush1.bf16.msra.mxu0 %v1427
    %1855 = vmatprep.subr.bf16.mxu0 %v1424
    %1856 = vmatpush1.bf16.msra.mxu0 %v1423
    %1857 = vmatprep.subr.bf16.mxu0 %v1484
    %1858 = vmatpush2.bf16.msra.mxu0 %v1483
    %1859 = vmatprep.subr.bf16.mxu0 %v1480
    %1860 = vmatpush2.bf16.msra.mxu0 %v1479
    %1861 = vmatprep.subr.bf16.mxu0 %v1476
    %1862 = vmatpush2.bf16.msra.mxu0 %v1475
    %1863 = vmatprep.subr.bf16.mxu0 %v1472
    %1864 = vmatpush2.bf16.msra.mxu0 %v1471
    %1865 = vmatprep.subr.bf16.mxu0 %v1468
    %1866 = vmatpush2.bf16.msra.mxu0 %v1467
    %1867 = vmatprep.subr.bf16.mxu0 %v1464
    %1868 = vmatpush2.bf16.msra.mxu0 %v1463
    %1869 = vmatprep.subr.bf16.mxu0 %v1460
    %1870 = vmatpush2.bf16.msra.mxu0 %v1459
    %1871 = vmatprep.subr.bf16.mxu0 %v1456
    %1872 = vmatpush2.bf16.msra.mxu0 %v1455
    %1873 = vmatprep.mubr.bf16.mxu0 %v693
    %1874 = vmatmul.mubr.bf16.gmra.mxu0 %v692
    %v1875 = vpop.f32.mrf.mxu0
    %v1876 = vadd.f32 %v1835, %v1875
    %v1877 = vpop.f32.mrf.mxu0
    %v1878 = vadd.f32 %v1837, %v1877
    %v1879 = vpop.f32.mrf.mxu0
    %v1880 = vpop.f32.mrf.mxu0
    %1881 = vdwg.mxu0
    %1882 = vmatprep.subr.bf16.mxu0 %v1516
    %1883 = vmatpush1.bf16.msra.mxu0 %v1515
    %1884 = vmatprep.subr.bf16.mxu0 %v1512
    %1885 = vmatpush1.bf16.msra.mxu0 %v1511
    %1886 = vmatprep.subr.bf16.mxu0 %v1508
    %1887 = vmatpush1.bf16.msra.mxu0 %v1507
    %1888 = vmatprep.subr.bf16.mxu0 %v1504
    %1889 = vmatpush1.bf16.msra.mxu0 %v1503
    %1890 = vmatprep.subr.bf16.mxu0 %v1500
    %1891 = vmatpush1.bf16.msra.mxu0 %v1499
    %1892 = vmatprep.subr.bf16.mxu0 %v1496
    %1893 = vmatpush1.bf16.msra.mxu0 %v1495
    %1894 = vmatprep.subr.bf16.mxu0 %v1492
    %1895 = vmatpush1.bf16.msra.mxu0 %v1491
    %1896 = vmatprep.subr.bf16.mxu0 %v1488
    %1897 = vmatpush1.bf16.msra.mxu0 %v1487
    %1898 = vmatprep.subr.bf16.mxu0 0
    %1899 = vmatpush2.bf16.msra.mxu0 0
    %1900 = vmatprep.subr.bf16.mxu0 0
    %1901 = vmatpush2.bf16.msra.mxu0 0
    %1902 = vmatprep.subr.bf16.mxu0 0
    %1903 = vmatpush2.bf16.msra.mxu0 0
    %1904 = vmatprep.subr.bf16.mxu0 0
    %1905 = vmatpush2.bf16.msra.mxu0 0
    %1906 = vmatprep.subr.bf16.mxu0 0
    %1907 = vmatpush2.bf16.msra.mxu0 0
    %1908 = vmatprep.subr.bf16.mxu0 0
    %1909 = vmatpush2.bf16.msra.mxu0 0
    %1910 = vmatprep.subr.bf16.mxu0 0
    %1911 = vmatpush2.bf16.msra.mxu0 0
    %1912 = vmatprep.subr.bf16.mxu0 0
    %1913 = vmatpush2.bf16.msra.mxu0 0
    %1914 = vmatprep.mubr.bf16.mxu0 0
    %1915 = vmatmul.mubr.bf16.gmra.mxu0 %v694
    %v1916 = vpop.f32.mrf.mxu0
    %v1917 = vadd.f32 %v1876, %v1916
    %v1918 = vpop.f32.mrf.mxu0
    %v1919 = vadd.f32 %v1878, %v1918
    %v1920 = vpop.f32.mrf.mxu0
    %v1921 = vpop.f32.mrf.mxu0
    %1922 = vdwg.mxu0
    %v1923 = vmax.f32 %v1794, 0.0
    %v1924 = vmax.f32 %v1796, 0.0
    %v1925 = vmax.f32 %v1917, 0.0
    %v1926 = vmax.f32 %v1919, 0.0
    %v1927 = vpack.c.bf16 %v1923, %v1923
    %v1928 = vpack.c.bf16 %v1924, %v1924
    %v1929 = vpack.c.bf16 %v1925, %v1925
    %v1930 = vpack.c.bf16 %v1926, %v1926
    %v1931 = vld [vmem:[#allocation10] sm:$0xf]
    %v1932 = vld [vmem:[#allocation10 + $0x4] sm:$0xf]
    %v1933 = vld [vmem:[#allocation10 + $0x8] sm:$0xf]
    %v1934 = vld [vmem:[#allocation10 + $0xc] sm:$0xf]
    %v1935 = vld [vmem:[#allocation10 + $0x10] sm:$0xf]
    %v1936 = vld [vmem:[#allocation10 + $0x14] sm:$0xf]
    %v1937 = vld [vmem:[#allocation10 + $0x18] sm:$0xf]
    %v1938 = vld [vmem:[#allocation10 + $0x1c] sm:$0xf]
    %v1939 = vld [vmem:[#allocation10 + $0x20] sm:$0xf]
    %v1940 = vld [vmem:[#allocation10 + $0x24] sm:$0xf]
    %v1941 = vld [vmem:[#allocation10 + $0x28] sm:$0xf]
    %v1942 = vld [vmem:[#allocation10 + $0x2c] sm:$0xf]
    %v1943 = vld [vmem:[#allocation10 + $0x30] sm:$0xf]
    %v1944 = vld [vmem:[#allocation10 + $0x34] sm:$0xf]
    %v1945 = vld [vmem:[#allocation10 + $0x38] sm:$0xf]
    %v1946 = vld [vmem:[#allocation10 + $0x3c] sm:$0xf]
    %v1947 = vld [vmem:[#allocation10 + $0x40] sm:$0xf]
    %v1948 = vld [vmem:[#allocation10 + $0x44] sm:$0xf]
    %v1949 = vld [vmem:[#allocation10 + $0x48] sm:$0xf]
    %v1950 = vld [vmem:[#allocation10 + $0x4c] sm:$0xf]
    %v1951 = vld [vmem:[#allocation10 + $0x50] sm:$0xf]
    %v1952 = vld [vmem:[#allocation10 + $0x54] sm:$0xf]
    %v1953 = vld [vmem:[#allocation10 + $0x58] sm:$0xf]
    %v1954 = vld [vmem:[#allocation10 + $0x5c] sm:$0xf]
    %v1955 = vld [vmem:[#allocation10 + $0x60] sm:$0xf]
    %v1956 = vld [vmem:[#allocation10 + $0x64] sm:$0xf]
    %v1957 = vld [vmem:[#allocation10 + $0x68] sm:$0xf]
    %v1958 = vld [vmem:[#allocation10 + $0x6c] sm:$0xf]
    %v1959 = vld [vmem:[#allocation10 + $0x70] sm:$0xf]
    %v1960 = vld [vmem:[#allocation10 + $0x74] sm:$0xf]
    %v1961 = vld [vmem:[#allocation10 + $0x78] sm:$0xf]
    %v1962 = vld [vmem:[#allocation10 + $0x7c] sm:$0xf]
    %v1963 = vld [vmem:[#allocation10 + $0x80] sm:$0xf]
    %v1964 = vld [vmem:[#allocation10 + $0x84] sm:$0xf]
    %v1965 = vld [vmem:[#allocation10 + $0x88] sm:$0xf]
    %v1966 = vld [vmem:[#allocation10 + $0x8c] sm:$0xf]
    %v1967 = vld [vmem:[#allocation10 + $0x90] sm:$0xf]
    %v1968 = vld [vmem:[#allocation10 + $0x94] sm:$0xf]
    %v1969 = vld [vmem:[#allocation10 + $0x98] sm:$0xf]
    %v1970 = vld [vmem:[#allocation10 + $0x9c] sm:$0xf]
    %v1971 = vld [vmem:[#allocation10 + $0xa0] sm:$0xf]
    %v1972 = vld [vmem:[#allocation10 + $0xa4] sm:$0xf]
    %v1973 = vld [vmem:[#allocation10 + $0xa8] sm:$0xf]
    %v1974 = vld [vmem:[#allocation10 + $0xac] sm:$0xf]
    %v1975 = vld [vmem:[#allocation10 + $0xb0] sm:$0xf]
    %v1976 = vld [vmem:[#allocation10 + $0xb4] sm:$0xf]
    %v1977 = vld [vmem:[#allocation10 + $0xb8] sm:$0xf]
    %v1978 = vld [vmem:[#allocation10 + $0xbc] sm:$0xf]
    %v1979 = vld [vmem:[#allocation10 + $0xc0] sm:$0xf]
    %v1980 = vld [vmem:[#allocation10 + $0xc4] sm:$0xf]
    %v1981 = vld [vmem:[#allocation10 + $0xc8] sm:$0xf]
    %v1982 = vld [vmem:[#allocation10 + $0xcc] sm:$0xf]
    %v1983 = vld [vmem:[#allocation10 + $0xd0] sm:$0xf]
    %v1984 = vld [vmem:[#allocation10 + $0xd4] sm:$0xf]
    %v1985 = vld [vmem:[#allocation10 + $0xd8] sm:$0xf]
    %v1986 = vld [vmem:[#allocation10 + $0xdc] sm:$0xf]
    %v1987 = vld [vmem:[#allocation10 + $0xe0] sm:$0xf]
    %v1988 = vld [vmem:[#allocation10 + $0xe4] sm:$0xf]
    %v1989 = vld [vmem:[#allocation10 + $0xe8] sm:$0xf]
    %v1990 = vld [vmem:[#allocation10 + $0xec] sm:$0xf]
    %v1991 = vld [vmem:[#allocation10 + $0xf0] sm:$0xf]
    %v1992 = vld [vmem:[#allocation10 + $0xf4] sm:$0xf]
    %v1993 = vld [vmem:[#allocation10 + $0xf8] sm:$0xf]
    %v1994 = vld [vmem:[#allocation10 + $0xfc] sm:$0xf]
    %v1995 = vld [vmem:[#allocation14 + $0x9] sm:$0x1]
    %v1997 = vlaneseq
    %v1998 = vshrl.u32 %v1997, 7
    %v1999 = vsub.s32 0, %v1998
    %v2000 = vrot.slane %v1995, %v1999
    %v2066 = vunpack.c.l.b16 %v1931
    %v2067 = vunpack.c.l.b16 %v1932
    %v2068 = vunpack.c.l.b16 %v1933
    %v2069 = vunpack.c.l.b16 %v1934
    %v2070 = vunpack.c.l.b16 %v1935
    %v2071 = vunpack.c.l.b16 %v1936
    %v2072 = vunpack.c.l.b16 %v1937
    %v2073 = vunpack.c.l.b16 %v1938
    %v2074 = vunpack.c.l.b16 %v1939
    %v2075 = vunpack.c.l.b16 %v1940
    %v2076 = vunpack.c.l.b16 %v1941
    %v2077 = vunpack.c.l.b16 %v1942
    %v2078 = vunpack.c.l.b16 %v1943
    %v2079 = vunpack.c.l.b16 %v1944
    %v2080 = vunpack.c.l.b16 %v1945
    %v2081 = vunpack.c.l.b16 %v1946
    %v2082 = vunpack.c.l.b16 %v1947
    %v2083 = vunpack.c.l.b16 %v1948
    %v2084 = vunpack.c.l.b16 %v1949
    %v2085 = vunpack.c.l.b16 %v1950
    %v2086 = vunpack.c.l.b16 %v1951
    %v2087 = vunpack.c.l.b16 %v1952
    %v2088 = vunpack.c.l.b16 %v1953
    %v2089 = vunpack.c.l.b16 %v1954
    %v2090 = vunpack.c.l.b16 %v1955
    %v2091 = vunpack.c.l.b16 %v1956
    %v2092 = vunpack.c.l.b16 %v1957
    %v2093 = vunpack.c.l.b16 %v1958
    %v2094 = vunpack.c.l.b16 %v1959
    %v2095 = vunpack.c.l.b16 %v1960
    %v2096 = vunpack.c.l.b16 %v1961
    %v2097 = vunpack.c.l.b16 %v1962
    %v2098 = vunpack.c.l.b16 %v1963
    %v2099 = vunpack.c.l.b16 %v1964
    %v2100 = vunpack.c.l.b16 %v1965
    %v2101 = vunpack.c.l.b16 %v1966
    %v2102 = vunpack.c.l.b16 %v1967
    %v2103 = vunpack.c.l.b16 %v1968
    %v2104 = vunpack.c.l.b16 %v1969
    %v2105 = vunpack.c.l.b16 %v1970
    %v2106 = vunpack.c.l.b16 %v1971
    %v2107 = vunpack.c.l.b16 %v1972
    %v2108 = vunpack.c.l.b16 %v1973
    %v2109 = vunpack.c.l.b16 %v1974
    %v2110 = vunpack.c.l.b16 %v1975
    %v2111 = vunpack.c.l.b16 %v1976
    %v2112 = vunpack.c.l.b16 %v1977
    %v2113 = vunpack.c.l.b16 %v1978
    %v2114 = vunpack.c.l.b16 %v1979
    %v2115 = vunpack.c.l.b16 %v1980
    %v2116 = vunpack.c.l.b16 %v1981
    %v2117 = vunpack.c.l.b16 %v1982
    %v2118 = vunpack.c.l.b16 %v1983
    %v2119 = vunpack.c.l.b16 %v1984
    %v2120 = vunpack.c.l.b16 %v1985
    %v2121 = vunpack.c.l.b16 %v1986
    %v2122 = vunpack.c.l.b16 %v1987
    %v2123 = vunpack.c.l.b16 %v1988
    %v2124 = vunpack.c.l.b16 %v1989
    %v2125 = vunpack.c.l.b16 %v1990
    %v2126 = vunpack.c.l.b16 %v1991
    %v2127 = vunpack.c.l.b16 %v1992
    %v2128 = vunpack.c.l.b16 %v1993
    %v2129 = vunpack.c.l.b16 %v1994
    %v2130 = vpack.c.b16 %v2067, %v2066
    %v2131 = vpack.c.b16 %v2069, %v2068
    %v2132 = vpack.c.b16 %v2071, %v2070
    %v2133 = vpack.c.b16 %v2073, %v2072
    %v2134 = vpack.c.b16 %v2075, %v2074
    %v2135 = vpack.c.b16 %v2077, %v2076
    %v2136 = vpack.c.b16 %v2079, %v2078
    %v2137 = vpack.c.b16 %v2081, %v2080
    %v2138 = vpack.c.b16 %v2083, %v2082
    %v2139 = vpack.c.b16 %v2085, %v2084
    %v2140 = vpack.c.b16 %v2087, %v2086
    %v2141 = vpack.c.b16 %v2089, %v2088
    %v2142 = vpack.c.b16 %v2091, %v2090
    %v2143 = vpack.c.b16 %v2093, %v2092
    %v2144 = vpack.c.b16 %v2095, %v2094
    %v2145 = vpack.c.b16 %v2097, %v2096
    %v2146 = vpack.c.b16 %v2099, %v2098
    %v2147 = vpack.c.b16 %v2101, %v2100
    %v2148 = vpack.c.b16 %v2103, %v2102
    %v2149 = vpack.c.b16 %v2105, %v2104
    %v2150 = vpack.c.b16 %v2107, %v2106
    %v2151 = vpack.c.b16 %v2109, %v2108
    %v2152 = vpack.c.b16 %v2111, %v2110
    %v2153 = vpack.c.b16 %v2113, %v2112
    %v2154 = vpack.c.b16 %v2115, %v2114
    %v2155 = vpack.c.b16 %v2117, %v2116
    %v2156 = vpack.c.b16 %v2119, %v2118
    %v2157 = vpack.c.b16 %v2121, %v2120
    %v2158 = vpack.c.b16 %v2123, %v2122
    %v2159 = vpack.c.b16 %v2125, %v2124
    %v2160 = vpack.c.b16 %v2127, %v2126
    %v2161 = vpack.c.b16 %v2129, %v2128
    %2194 = vmatprep.subr.bf16.mxu0 0
    %2195 = vmatpush1.bf16.msra.mxu0 %v2137
    %2196 = vmatprep.subr.bf16.mxu0 0
    %2197 = vmatpush1.bf16.msra.mxu0 %v2136
    %2198 = vmatprep.subr.bf16.mxu0 0
    %2199 = vmatpush1.bf16.msra.mxu0 %v2135
    %2200 = vmatprep.subr.bf16.mxu0 0
    %2201 = vmatpush1.bf16.msra.mxu0 %v2134
    %2202 = vmatprep.subr.bf16.mxu0 0
    %2203 = vmatpush1.bf16.msra.mxu0 %v2133
    %2204 = vmatprep.subr.bf16.mxu0 0
    %2205 = vmatpush1.bf16.msra.mxu0 %v2132
    %2206 = vmatprep.subr.bf16.mxu0 0
    %2207 = vmatpush1.bf16.msra.mxu0 %v2131
    %2208 = vmatprep.subr.bf16.mxu0 0
    %2209 = vmatpush1.bf16.msra.mxu0 %v2130
    %2210 = vmatprep.subr.bf16.mxu0 0
    %2211 = vmatpush2.bf16.msra.mxu0 %v2145
    %2212 = vmatprep.subr.bf16.mxu0 0
    %2213 = vmatpush2.bf16.msra.mxu0 %v2144
    %2214 = vmatprep.subr.bf16.mxu0 0
    %2215 = vmatpush2.bf16.msra.mxu0 %v2143
    %2216 = vmatprep.subr.bf16.mxu0 0
    %2217 = vmatpush2.bf16.msra.mxu0 %v2142
    %2218 = vmatprep.subr.bf16.mxu0 0
    %2219 = vmatpush2.bf16.msra.mxu0 %v2141
    %2220 = vmatprep.subr.bf16.mxu0 0
    %2221 = vmatpush2.bf16.msra.mxu0 %v2140
    %2222 = vmatprep.subr.bf16.mxu0 0
    %2223 = vmatpush2.bf16.msra.mxu0 %v2139
    %2224 = vmatprep.subr.bf16.mxu0 0
    %2225 = vmatpush2.bf16.msra.mxu0 %v2138
    %2226 = vmatprep.mubr.bf16.mxu0 %v1928
    %2227 = vmatmul.mubr.bf16.gmra.mxu0 %v1927
    %v2228 = vpop.f32.mrf.mxu0
    %v2229 = vadd.f32 %v2000, %v2228
    %v2230 = vpop.f32.mrf.mxu0
    %v2231 = vpop.f32.mrf.mxu0
    %v2232 = vpop.f32.mrf.mxu0
    %2233 = vdwg.mxu0
    %2234 = vmatprep.subr.bf16.mxu0 0
    %2235 = vmatpush1.bf16.msra.mxu0 %v2153
    %2236 = vmatprep.subr.bf16.mxu0 0
    %2237 = vmatpush1.bf16.msra.mxu0 %v2152
    %2238 = vmatprep.subr.bf16.mxu0 0
    %2239 = vmatpush1.bf16.msra.mxu0 %v2151
    %2240 = vmatprep.subr.bf16.mxu0 0
    %2241 = vmatpush1.bf16.msra.mxu0 %v2150
    %2242 = vmatprep.subr.bf16.mxu0 0
    %2243 = vmatpush1.bf16.msra.mxu0 %v2149
    %2244 = vmatprep.subr.bf16.mxu0 0
    %2245 = vmatpush1.bf16.msra.mxu0 %v2148
    %2246 = vmatprep.subr.bf16.mxu0 0
    %2247 = vmatpush1.bf16.msra.mxu0 %v2147
    %2248 = vmatprep.subr.bf16.mxu0 0
    %2249 = vmatpush1.bf16.msra.mxu0 %v2146
    %2250 = vmatprep.subr.bf16.mxu0 0
    %2251 = vmatpush2.bf16.msra.mxu0 %v2161
    %2252 = vmatprep.subr.bf16.mxu0 0
    %2253 = vmatpush2.bf16.msra.mxu0 %v2160
    %2254 = vmatprep.subr.bf16.mxu0 0
    %2255 = vmatpush2.bf16.msra.mxu0 %v2159
    %2256 = vmatprep.subr.bf16.mxu0 0
    %2257 = vmatpush2.bf16.msra.mxu0 %v2158
    %2258 = vmatprep.subr.bf16.mxu0 0
    %2259 = vmatpush2.bf16.msra.mxu0 %v2157
    %2260 = vmatprep.subr.bf16.mxu0 0
    %2261 = vmatpush2.bf16.msra.mxu0 %v2156
    %2262 = vmatprep.subr.bf16.mxu0 0
    %2263 = vmatpush2.bf16.msra.mxu0 %v2155
    %2264 = vmatprep.subr.bf16.mxu0 0
    %2265 = vmatpush2.bf16.msra.mxu0 %v2154
    %2266 = vmatprep.mubr.bf16.mxu0 %v1930
    %2267 = vmatmul.mubr.bf16.gmra.mxu0 %v1929
    %v2268 = vpop.f32.mrf.mxu0
    %v2269 = vadd.f32 %v2229, %v2268
    %v2270 = vpop.f32.mrf.mxu0
    %v2271 = vpop.f32.mrf.mxu0
    %v2272 = vpop.f32.mrf.mxu0
    %2273 = vdwg.mxu0
    %v2274 = vmax.f32 %v2269, 0.0
    %v2275 = vld [vmem:[#allocation11] sm:$0xf]
    %v2276 = vld [vmem:[#allocation11 + $0x14] sm:$0xf]
    %v2277 = vld [vmem:[#allocation11 + $0x28] sm:$0xf]
    %v2278 = vld [vmem:[#allocation11 + $0x3c] sm:$0xf]
    %v2279 = vld [vmem:[#allocation11 + $0x50] sm:$0xf]
    %v2280 = vld [vmem:[#allocation11 + $0x64] sm:$0xf]
    %v2281 = vld [vmem:[#allocation11 + $0x78] sm:$0xf]
    %v2282 = vld [vmem:[#allocation11 + $0x8c] sm:$0xf]
    %v2283 = vld [vmem:[#allocation11 + $0xa0] sm:$0xf]
    %v2284 = vld [vmem:[#allocation11 + $0xb4] sm:$0xf]
    %v2285 = vld [vmem:[#allocation11 + $0xc8] sm:$0xf]
    %v2286 = vld [vmem:[#allocation11 + $0xdc] sm:$0xf]
    %v2287 = vld [vmem:[#allocation11 + $0xf0] sm:$0xf]
    %v2288 = vld [vmem:[#allocation11 + $0x104] sm:$0xf]
    %v2289 = vld [vmem:[#allocation11 + $0x118] sm:$0xf]
    %v2290 = vld [vmem:[#allocation11 + $0x12c] sm:$0xf]
    %v2291 = vld [vmem:[#allocation11 + $0x4] sm:$0xff]
    %v2292 = vld [vmem:[#allocation11 + $0x18] sm:$0xff]
    %v2293 = vld [vmem:[#allocation11 + $0x2c] sm:$0xff]
    %v2294 = vld [vmem:[#allocation11 + $0x40] sm:$0xff]
    %v2295 = vld [vmem:[#allocation11 + $0x54] sm:$0xff]
    %v2296 = vld [vmem:[#allocation11 + $0x68] sm:$0xff]
    %v2297 = vld [vmem:[#allocation11 + $0x7c] sm:$0xff]
    %v2298 = vld [vmem:[#allocation11 + $0x90] sm:$0xff]
    %v2299 = vld [vmem:[#allocation11 + $0xa4] sm:$0xff]
    %v2300 = vld [vmem:[#allocation11 + $0xb8] sm:$0xff]
    %v2301 = vld [vmem:[#allocation11 + $0xcc] sm:$0xff]
    %v2302 = vld [vmem:[#allocation11 + $0xe0] sm:$0xff]
    %v2303 = vld [vmem:[#allocation11 + $0xf4] sm:$0xff]
    %v2304 = vld [vmem:[#allocation11 + $0x108] sm:$0xff]
    %v2305 = vld [vmem:[#allocation11 + $0x11c] sm:$0xff]
    %v2306 = vld [vmem:[#allocation11 + $0x130] sm:$0xff]
    %v2307 = vld [vmem:[#allocation11 + $0xc] sm:$0xff]
    %v2308 = vld [vmem:[#allocation11 + $0x20] sm:$0xff]
    %v2309 = vld [vmem:[#allocation11 + $0x34] sm:$0xff]
    %v2310 = vld [vmem:[#allocation11 + $0x48] sm:$0xff]
    %v2311 = vld [vmem:[#allocation11 + $0x5c] sm:$0xff]
    %v2312 = vld [vmem:[#allocation11 + $0x70] sm:$0xff]
    %v2313 = vld [vmem:[#allocation11 + $0x84] sm:$0xff]
    %v2314 = vld [vmem:[#allocation11 + $0x98] sm:$0xff]
    %v2315 = vld [vmem:[#allocation11 + $0xac] sm:$0xff]
    %v2316 = vld [vmem:[#allocation11 + $0xc0] sm:$0xff]
    %v2317 = vld [vmem:[#allocation11 + $0xd4] sm:$0xff]
    %v2318 = vld [vmem:[#allocation11 + $0xe8] sm:$0xff]
    %v2319 = vld [vmem:[#allocation11 + $0xfc] sm:$0xff]
    %v2320 = vld [vmem:[#allocation11 + $0x110] sm:$0xff]
    %v2321 = vld [vmem:[#allocation11 + $0x124] sm:$0xff]
    %v2322 = vld [vmem:[#allocation11 + $0x138] sm:$0xff]
    %v2323 = vld [vmem:[#allocation13] sm:$0xf]
    %v2324 = vld [vmem:[#allocation13 + $0x8] sm:$0xf]
    %v2325 = vld [vmem:[#allocation13 + $0x10] sm:$0xf]
    %v2326 = vld [vmem:[#allocation13 + $0x18] sm:$0xf]
    %v2327 = vld [vmem:[#allocation13 + $0x20] sm:$0xf]
    %v2328 = vld [vmem:[#allocation13 + $0x28] sm:$0xf]
    %v2329 = vld [vmem:[#allocation13 + $0x30] sm:$0xf]
    %v2330 = vld [vmem:[#allocation13 + $0x38] sm:$0xf]
    %v2331 = vld [vmem:[#allocation13 + $0x4] sm:$0xf]
    %v2332 = vld [vmem:[#allocation13 + $0xc] sm:$0xf]
    %v2333 = vld [vmem:[#allocation13 + $0x14] sm:$0xf]
    %v2334 = vld [vmem:[#allocation13 + $0x1c] sm:$0xf]
    %v2335 = vld [vmem:[#allocation13 + $0x24] sm:$0xf]
    %v2336 = vld [vmem:[#allocation13 + $0x2c] sm:$0xf]
    %v2337 = vld [vmem:[#allocation13 + $0x34] sm:$0xf]
    %v2338 = vld [vmem:[#allocation13 + $0x3c] sm:$0xf]
    %v2339 = vld [vmem:[#allocation5] sm:$0x3]
    %v2340 = vadd.f32 %v2274, %v2339
    %v2341 = vpack.c.bf16 %v2340, %v2340
    %v2342 = vld [vmem:[#allocation14 + $0xa] sm:$0x1]
    %v2344 = vlaneseq
    %v2345 = vshrl.u32 %v2344, 7
    %v2346 = vsub.s32 0, %v2345
    %v2347 = vrot.slane %v2342, %v2346
    %v2365 = vunpack.c.l.b16 %v2275
    %v2366 = vunpack.c.l.b16 %v2276
    %v2367 = vunpack.c.l.b16 %v2277
    %v2368 = vunpack.c.l.b16 %v2278
    %v2369 = vunpack.c.l.b16 %v2279
    %v2370 = vunpack.c.l.b16 %v2280
    %v2371 = vunpack.c.l.b16 %v2281
    %v2372 = vunpack.c.l.b16 %v2282
    %v2373 = vunpack.c.l.b16 %v2283
    %v2374 = vunpack.c.l.b16 %v2284
    %v2375 = vunpack.c.l.b16 %v2285
    %v2376 = vunpack.c.l.b16 %v2286
    %v2377 = vunpack.c.l.b16 %v2287
    %v2378 = vunpack.c.l.b16 %v2288
    %v2379 = vunpack.c.l.b16 %v2289
    %v2380 = vunpack.c.l.b16 %v2290
    %v2381 = vpack.c.b16 %v2366, %v2365
    %v2382 = vpack.c.b16 %v2368, %v2367
    %v2383 = vpack.c.b16 %v2370, %v2369
    %v2384 = vpack.c.b16 %v2372, %v2371
    %v2385 = vpack.c.b16 %v2374, %v2373
    %v2386 = vpack.c.b16 %v2376, %v2375
    %v2387 = vpack.c.b16 %v2378, %v2377
    %v2388 = vpack.c.b16 %v2380, %v2379
    %2397 = vmatprep.subr.bf16.mxu0 0
    %2398 = vmatpush1.bf16.msra.mxu0 %v2388
    %2399 = vmatprep.subr.bf16.mxu0 0
    %2400 = vmatpush1.bf16.msra.mxu0 %v2387
    %2401 = vmatprep.subr.bf16.mxu0 0
    %2402 = vmatpush1.bf16.msra.mxu0 %v2386
    %2403 = vmatprep.subr.bf16.mxu0 0
    %2404 = vmatpush1.bf16.msra.mxu0 %v2385
    %2405 = vmatprep.subr.bf16.mxu0 0
    %2406 = vmatpush1.bf16.msra.mxu0 %v2384
    %2407 = vmatprep.subr.bf16.mxu0 0
    %2408 = vmatpush1.bf16.msra.mxu0 %v2383
    %2409 = vmatprep.subr.bf16.mxu0 0
    %2410 = vmatpush1.bf16.msra.mxu0 %v2382
    %2411 = vmatprep.subr.bf16.mxu0 0
    %2412 = vmatpush1.bf16.msra.mxu0 %v2381
    %2413 = vmatprep.subr.bf16.mxu0 0
    %2414 = vmatpush2.bf16.msra.mxu0 0
    %2415 = vmatprep.subr.bf16.mxu0 0
    %2416 = vmatpush2.bf16.msra.mxu0 0
    %2417 = vmatprep.subr.bf16.mxu0 0
    %2418 = vmatpush2.bf16.msra.mxu0 0
    %2419 = vmatprep.subr.bf16.mxu0 0
    %2420 = vmatpush2.bf16.msra.mxu0 0
    %2421 = vmatprep.subr.bf16.mxu0 0
    %2422 = vmatpush2.bf16.msra.mxu0 0
    %2423 = vmatprep.subr.bf16.mxu0 0
    %2424 = vmatpush2.bf16.msra.mxu0 0
    %2425 = vmatprep.subr.bf16.mxu0 0
    %2426 = vmatpush2.bf16.msra.mxu0 0
    %2427 = vmatprep.subr.bf16.mxu0 0
    %2428 = vmatpush2.bf16.msra.mxu0 0
    %2429 = vmatprep.mubr.bf16.mxu0 0
    %2430 = vmatmul.mubr.bf16.gmra.mxu0 %v2341
    %v2431 = vpop.f32.mrf.mxu0
    %v2432 = vadd.f32 %v2347, %v2431
    %v2433 = vpop.f32.mrf.mxu0
    %v2434 = vpop.f32.mrf.mxu0
    %v2435 = vpop.f32.mrf.mxu0
    %2436 = vdwg.mxu0
    %v2437 = vmul.f32 %v2432, 0.666
    %v2438 = vtanh.pop %v2437
    %v2439 = vmul.f32 %v2438, 1.7159
    %v2440 = vpack.c.bf16 %v2439, %v2439
    %v2441 = vld [vmem:[#allocation14 + $0xb] sm:$0x3]
    %v2443 = vlaneseq
    %v2444 = vshrl.u32 %v2443, 7
    %v2445 = vsub.s32 0, %v2444
    %v2446 = vrot.slane %v2441, %v2445
    %v2447 = vlaneseq
    %v2448 = vshrl.u32 %v2447, 7
    %v2449 = vsub.s32 1, %v2448
    %v2450 = vrot.slane %v2441, %v2449
    %v2469 = vunpack.c.l.b16 %v2291
    %v2470 = vunpack.c.h.b16 %v2291
    %v2471 = vunpack.c.l.b16 %v2292
    %v2472 = vunpack.c.h.b16 %v2292
    %v2473 = vunpack.c.l.b16 %v2293
    %v2474 = vunpack.c.h.b16 %v2293
    %v2475 = vunpack.c.l.b16 %v2294
    %v2476 = vunpack.c.h.b16 %v2294
    %v2477 = vunpack.c.l.b16 %v2295
    %v2478 = vunpack.c.h.b16 %v2295
    %v2479 = vunpack.c.l.b16 %v2296
    %v2480 = vunpack.c.h.b16 %v2296
    %v2481 = vunpack.c.l.b16 %v2297
    %v2482 = vunpack.c.h.b16 %v2297
    %v2483 = vunpack.c.l.b16 %v2298
    %v2484 = vunpack.c.h.b16 %v2298
    %v2485 = vunpack.c.l.b16 %v2299
    %v2486 = vunpack.c.h.b16 %v2299
    %v2487 = vunpack.c.l.b16 %v2300
    %v2488 = vunpack.c.h.b16 %v2300
    %v2489 = vunpack.c.l.b16 %v2301
    %v2490 = vunpack.c.h.b16 %v2301
    %v2491 = vunpack.c.l.b16 %v2302
    %v2492 = vunpack.c.h.b16 %v2302
    %v2493 = vunpack.c.l.b16 %v2303
    %v2494 = vunpack.c.h.b16 %v2303
    %v2495 = vunpack.c.l.b16 %v2304
    %v2496 = vunpack.c.h.b16 %v2304
    %v2497 = vunpack.c.l.b16 %v2305
    %v2498 = vunpack.c.h.b16 %v2305
    %v2499 = vunpack.c.l.b16 %v2306
    %v2500 = vunpack.c.h.b16 %v2306
    %v2501 = vpack.c.b16 %v2471, %v2469
    %v2502 = vpack.c.b16 %v2472, %v2470
    %v2503 = vpack.c.b16 %v2475, %v2473
    %v2504 = vpack.c.b16 %v2476, %v2474
    %v2505 = vpack.c.b16 %v2479, %v2477
    %v2506 = vpack.c.b16 %v2480, %v2478
    %v2507 = vpack.c.b16 %v2483, %v2481
    %v2508 = vpack.c.b16 %v2484, %v2482
    %v2509 = vpack.c.b16 %v2487, %v2485
    %v2510 = vpack.c.b16 %v2488, %v2486
    %v2511 = vpack.c.b16 %v2491, %v2489
    %v2512 = vpack.c.b16 %v2492, %v2490
    %v2513 = vpack.c.b16 %v2495, %v2493
    %v2514 = vpack.c.b16 %v2496, %v2494
    %v2515 = vpack.c.b16 %v2499, %v2497
    %v2516 = vpack.c.b16 %v2500, %v2498
    %2533 = vmatprep.subr.bf16.mxu0 %v2516
    %2534 = vmatpush1.bf16.msra.mxu0 %v2515
    %2535 = vmatprep.subr.bf16.mxu0 %v2514
    %2536 = vmatpush1.bf16.msra.mxu0 %v2513
    %2537 = vmatprep.subr.bf16.mxu0 %v2512
    %2538 = vmatpush1.bf16.msra.mxu0 %v2511
    %2539 = vmatprep.subr.bf16.mxu0 %v2510
    %2540 = vmatpush1.bf16.msra.mxu0 %v2509
    %2541 = vmatprep.subr.bf16.mxu0 %v2508
    %2542 = vmatpush1.bf16.msra.mxu0 %v2507
    %2543 = vmatprep.subr.bf16.mxu0 %v2506
    %2544 = vmatpush1.bf16.msra.mxu0 %v2505
    %2545 = vmatprep.subr.bf16.mxu0 %v2504
    %2546 = vmatpush1.bf16.msra.mxu0 %v2503
    %2547 = vmatprep.subr.bf16.mxu0 %v2502
    %2548 = vmatpush1.bf16.msra.mxu0 %v2501
    %2549 = vmatprep.subr.bf16.mxu0 0
    %2550 = vmatpush2.bf16.msra.mxu0 0
    %2551 = vmatprep.subr.bf16.mxu0 0
    %2552 = vmatpush2.bf16.msra.mxu0 0
    %2553 = vmatprep.subr.bf16.mxu0 0
    %2554 = vmatpush2.bf16.msra.mxu0 0
    %2555 = vmatprep.subr.bf16.mxu0 0
    %2556 = vmatpush2.bf16.msra.mxu0 0
    %2557 = vmatprep.subr.bf16.mxu0 0
    %2558 = vmatpush2.bf16.msra.mxu0 0
    %2559 = vmatprep.subr.bf16.mxu0 0
    %2560 = vmatpush2.bf16.msra.mxu0 0
    %2561 = vmatprep.subr.bf16.mxu0 0
    %2562 = vmatpush2.bf16.msra.mxu0 0
    %2563 = vmatprep.subr.bf16.mxu0 0
    %2564 = vmatpush2.bf16.msra.mxu0 0
    %2565 = vmatprep.mubr.bf16.mxu0 0
    %2566 = vmatmul.mubr.bf16.gmra.mxu0 %v2440
    %v2567 = vpop.f32.mrf.mxu0
    %v2568 = vadd.f32 %v2446, %v2567
    %v2569 = vpop.f32.mrf.mxu0
    %v2570 = vadd.f32 %v2450, %v2569
    %v2571 = vpop.f32.mrf.mxu0
    %v2572 = vpop.f32.mrf.mxu0
    %2573 = vdwg.mxu0
    %v2574 = vtanh.pop %v2568
    %v2575 = vxor.u32 %v2570, 2147483648
    %v2576 = vmul.f32 %v2575, 1.442695
    %v2577 = vpow.pop %v2576
    %v2578 = vadd.f32 %v2577, 1.0
    %v2579 = vrcp.pop %v2578
    %v2580 = vmul.f32 1.0, %v2579
    %2582 = vrot.lane.b32.xlu0 %v2574, 64
    %v2583 = vpop.permute.xlu0 %2582
    %v2585 = vsub.f32 %v2574, %v2583
    %2587 = vrot.lane.b32.xlu0 %v2585, 64
    %v2588 = vpop.permute.xlu0 %2587
    %v2590 = vmul.f32 %v2580, %v2588
    %v2591 = vadd.f32 %v2574, %v2590
    %v2592 = vpack.c.bf16 %v2591, %v2591
    %v2593 = vld [vmem:[#allocation14 + $0xd] sm:$0x1]
    %v2595 = vlaneseq
    %v2596 = vshrl.u32 %v2595, 7
    %v2597 = vsub.s32 0, %v2596
    %v2598 = vrot.slane %v2593, %v2597
    %v2608 = vunpack.c.l.b16 %v2323
    %v2609 = vunpack.c.l.b16 %v2324
    %v2610 = vunpack.c.l.b16 %v2325
    %v2611 = vunpack.c.l.b16 %v2326
    %v2612 = vunpack.c.l.b16 %v2327
    %v2613 = vunpack.c.l.b16 %v2328
    %v2614 = vunpack.c.l.b16 %v2329
    %v2615 = vunpack.c.l.b16 %v2330
    %v2616 = vpack.c.b16 %v2609, %v2608
    %v2617 = vpack.c.b16 %v2611, %v2610
    %v2618 = vpack.c.b16 %v2613, %v2612
    %v2619 = vpack.c.b16 %v2615, %v2614
    %v2625 = vsel %vm559, %v2592, 0
    %2627 = vmatprep.subr.bf16.mxu0 0
    %2628 = vmatpush1.bf16.msra.mxu0 0
    %2629 = vmatprep.subr.bf16.mxu0 0
    %2630 = vmatpush1.bf16.msra.mxu0 0
    %2631 = vmatprep.subr.bf16.mxu0 0
    %2632 = vmatpush1.bf16.msra.mxu0 0
    %2633 = vmatprep.subr.bf16.mxu0 0
    %2634 = vmatpush1.bf16.msra.mxu0 0
    %2635 = vmatprep.subr.bf16.mxu0 0
    %2636 = vmatpush1.bf16.msra.mxu0 %v2619
    %2637 = vmatprep.subr.bf16.mxu0 0
    %2638 = vmatpush1.bf16.msra.mxu0 %v2618
    %2639 = vmatprep.subr.bf16.mxu0 0
    %2640 = vmatpush1.bf16.msra.mxu0 %v2617
    %2641 = vmatprep.subr.bf16.mxu0 0
    %2642 = vmatpush1.bf16.msra.mxu0 %v2616
    %2643 = vmatprep.subr.bf16.mxu0 0
    %2644 = vmatpush2.bf16.msra.mxu0 0
    %2645 = vmatprep.subr.bf16.mxu0 0
    %2646 = vmatpush2.bf16.msra.mxu0 0
    %2647 = vmatprep.subr.bf16.mxu0 0
    %2648 = vmatpush2.bf16.msra.mxu0 0
    %2649 = vmatprep.subr.bf16.mxu0 0
    %2650 = vmatpush2.bf16.msra.mxu0 0
    %2651 = vmatprep.subr.bf16.mxu0 0
    %2652 = vmatpush2.bf16.msra.mxu0 0
    %2653 = vmatprep.subr.bf16.mxu0 0
    %2654 = vmatpush2.bf16.msra.mxu0 0
    %2655 = vmatprep.subr.bf16.mxu0 0
    %2656 = vmatpush2.bf16.msra.mxu0 0
    %2657 = vmatprep.subr.bf16.mxu0 0
    %2658 = vmatpush2.bf16.msra.mxu0 0
    %2659 = vmatprep.mubr.bf16.mxu0 0
    %2660 = vmatmul.mubr.bf16.gmra.mxu0 %v2625
    %v2661 = vpop.f32.mrf.mxu0
    %v2662 = vadd.f32 %v2598, %v2661
    %v2663 = vpop.f32.mrf.mxu0
    %v2664 = vpop.f32.mrf.mxu0
    %v2665 = vpop.f32.mrf.mxu0
    %2666 = vdwg.mxu0
    %v2667 = vmul.f32 %v2662, 0.666
    %v2668 = vtanh.pop %v2667
    %v2669 = vmul.f32 %v2668, 1.7159
    %v2670 = vpack.c.bf16 %v2669, %v2669
    %v2671 = vld [vmem:[#allocation14 + $0xe] sm:$0x3]
    %v2673 = vlaneseq
    %v2674 = vshrl.u32 %v2673, 7
    %v2675 = vsub.s32 0, %v2674
    %v2676 = vrot.slane %v2671, %v2675
    %v2677 = vlaneseq
    %v2678 = vshrl.u32 %v2677, 7
    %v2679 = vsub.s32 1, %v2678
    %v2680 = vrot.slane %v2671, %v2679
    %v2699 = vunpack.c.l.b16 %v2307
    %v2700 = vunpack.c.h.b16 %v2307
    %v2701 = vunpack.c.l.b16 %v2308
    %v2702 = vunpack.c.h.b16 %v2308
    %v2703 = vunpack.c.l.b16 %v2309
    %v2704 = vunpack.c.h.b16 %v2309
    %v2705 = vunpack.c.l.b16 %v2310
    %v2706 = vunpack.c.h.b16 %v2310
    %v2707 = vunpack.c.l.b16 %v2311
    %v2708 = vunpack.c.h.b16 %v2311
    %v2709 = vunpack.c.l.b16 %v2312
    %v2710 = vunpack.c.h.b16 %v2312
    %v2711 = vunpack.c.l.b16 %v2313
    %v2712 = vunpack.c.h.b16 %v2313
    %v2713 = vunpack.c.l.b16 %v2314
    %v2714 = vunpack.c.h.b16 %v2314
    %v2715 = vunpack.c.l.b16 %v2315
    %v2716 = vunpack.c.h.b16 %v2315
    %v2717 = vunpack.c.l.b16 %v2316
    %v2718 = vunpack.c.h.b16 %v2316
    %v2719 = vunpack.c.l.b16 %v2317
    %v2720 = vunpack.c.h.b16 %v2317
    %v2721 = vunpack.c.l.b16 %v2318
    %v2722 = vunpack.c.h.b16 %v2318
    %v2723 = vunpack.c.l.b16 %v2319
    %v2724 = vunpack.c.h.b16 %v2319
    %v2725 = vunpack.c.l.b16 %v2320
    %v2726 = vunpack.c.h.b16 %v2320
    %v2727 = vunpack.c.l.b16 %v2321
    %v2728 = vunpack.c.h.b16 %v2321
    %v2729 = vunpack.c.l.b16 %v2322
    %v2730 = vunpack.c.h.b16 %v2322
    %v2731 = vpack.c.b16 %v2701, %v2699
    %v2732 = vpack.c.b16 %v2702, %v2700
    %v2733 = vpack.c.b16 %v2705, %v2703
    %v2734 = vpack.c.b16 %v2706, %v2704
    %v2735 = vpack.c.b16 %v2709, %v2707
    %v2736 = vpack.c.b16 %v2710, %v2708
    %v2737 = vpack.c.b16 %v2713, %v2711
    %v2738 = vpack.c.b16 %v2714, %v2712
    %v2739 = vpack.c.b16 %v2717, %v2715
    %v2740 = vpack.c.b16 %v2718, %v2716
    %v2741 = vpack.c.b16 %v2721, %v2719
    %v2742 = vpack.c.b16 %v2722, %v2720
    %v2743 = vpack.c.b16 %v2725, %v2723
    %v2744 = vpack.c.b16 %v2726, %v2724
    %v2745 = vpack.c.b16 %v2729, %v2727
    %v2746 = vpack.c.b16 %v2730, %v2728
    %2763 = vmatprep.subr.bf16.mxu0 %v2746
    %2764 = vmatpush1.bf16.msra.mxu0 %v2745
    %2765 = vmatprep.subr.bf16.mxu0 %v2744
    %2766 = vmatpush1.bf16.msra.mxu0 %v2743
    %2767 = vmatprep.subr.bf16.mxu0 %v2742
    %2768 = vmatpush1.bf16.msra.mxu0 %v2741
    %2769 = vmatprep.subr.bf16.mxu0 %v2740
    %2770 = vmatpush1.bf16.msra.mxu0 %v2739
    %2771 = vmatprep.subr.bf16.mxu0 %v2738
    %2772 = vmatpush1.bf16.msra.mxu0 %v2737
    %2773 = vmatprep.subr.bf16.mxu0 %v2736
    %2774 = vmatpush1.bf16.msra.mxu0 %v2735
    %2775 = vmatprep.subr.bf16.mxu0 %v2734
    %2776 = vmatpush1.bf16.msra.mxu0 %v2733
    %2777 = vmatprep.subr.bf16.mxu0 %v2732
    %2778 = vmatpush1.bf16.msra.mxu0 %v2731
    %2779 = vmatprep.subr.bf16.mxu0 0
    %2780 = vmatpush2.bf16.msra.mxu0 0
    %2781 = vmatprep.subr.bf16.mxu0 0
    %2782 = vmatpush2.bf16.msra.mxu0 0
    %2783 = vmatprep.subr.bf16.mxu0 0
    %2784 = vmatpush2.bf16.msra.mxu0 0
    %2785 = vmatprep.subr.bf16.mxu0 0
    %2786 = vmatpush2.bf16.msra.mxu0 0
    %2787 = vmatprep.subr.bf16.mxu0 0
    %2788 = vmatpush2.bf16.msra.mxu0 0
    %2789 = vmatprep.subr.bf16.mxu0 0
    %2790 = vmatpush2.bf16.msra.mxu0 0
    %2791 = vmatprep.subr.bf16.mxu0 0
    %2792 = vmatpush2.bf16.msra.mxu0 0
    %2793 = vmatprep.subr.bf16.mxu0 0
    %2794 = vmatpush2.bf16.msra.mxu0 0
    %2795 = vmatprep.mubr.bf16.mxu0 0
    %2796 = vmatmul.mubr.bf16.gmra.mxu0 %v2670
    %v2797 = vpop.f32.mrf.mxu0
    %v2798 = vadd.f32 %v2676, %v2797
    %v2799 = vpop.f32.mrf.mxu0
    %v2800 = vadd.f32 %v2680, %v2799
    %v2801 = vpop.f32.mrf.mxu0
    %v2802 = vpop.f32.mrf.mxu0
    %2803 = vdwg.mxu0
    %v2804 = vtanh.pop %v2798
    %v2805 = vxor.u32 %v2800, 2147483648
    %v2806 = vmul.f32 %v2805, 1.442695
    %v2807 = vpow.pop %v2806
    %v2808 = vadd.f32 %v2807, 1.0
    %v2809 = vrcp.pop %v2808
    %v2810 = vmul.f32 1.0, %v2809
    %2812 = vrot.lane.b32.xlu0 %v2804, 64
    %v2813 = vpop.permute.xlu0 %2812
    %v2815 = vsub.f32 %v2804, %v2813
    %2817 = vrot.lane.b32.xlu0 %v2815, 64
    %v2818 = vpop.permute.xlu0 %2817
    %v2820 = vmul.f32 %v2810, %v2818
    %v2821 = vadd.f32 %v2804, %v2820
    %v2822 = vpack.c.bf16 %v2821, %v2821
    %v2823 = vld [vmem:[#allocation14 + $0x10] sm:$0x1]
    %v2825 = vlaneseq
    %v2826 = vshrl.u32 %v2825, 7
    %v2827 = vsub.s32 0, %v2826
    %v2828 = vrot.slane %v2823, %v2827
    %v2838 = vunpack.c.l.b16 %v2331
    %v2839 = vunpack.c.l.b16 %v2332
    %v2840 = vunpack.c.l.b16 %v2333
    %v2841 = vunpack.c.l.b16 %v2334
    %v2842 = vunpack.c.l.b16 %v2335
    %v2843 = vunpack.c.l.b16 %v2336
    %v2844 = vunpack.c.l.b16 %v2337
    %v2845 = vunpack.c.l.b16 %v2338
    %v2846 = vpack.c.b16 %v2839, %v2838
    %v2847 = vpack.c.b16 %v2841, %v2840
    %v2848 = vpack.c.b16 %v2843, %v2842
    %v2849 = vpack.c.b16 %v2845, %v2844
    %v2855 = vsel %vm559, %v2822, 0
    %2857 = vmatprep.subr.bf16.mxu0 0
    %2858 = vmatpush1.bf16.msra.mxu0 0
    %2859 = vmatprep.subr.bf16.mxu0 0
    %2860 = vmatpush1.bf16.msra.mxu0 0
    %2861 = vmatprep.subr.bf16.mxu0 0
    %2862 = vmatpush1.bf16.msra.mxu0 0
    %2863 = vmatprep.subr.bf16.mxu0 0
    %2864 = vmatpush1.bf16.msra.mxu0 0
    %2865 = vmatprep.subr.bf16.mxu0 0
    %2866 = vmatpush1.bf16.msra.mxu0 %v2849
    %2867 = vmatprep.subr.bf16.mxu0 0
    %2868 = vmatpush1.bf16.msra.mxu0 %v2848
    %2869 = vmatprep.subr.bf16.mxu0 0
    %2870 = vmatpush1.bf16.msra.mxu0 %v2847
    %2871 = vmatprep.subr.bf16.mxu0 0
    %2872 = vmatpush1.bf16.msra.mxu0 %v2846
    %2873 = vmatprep.subr.bf16.mxu0 0
    %2874 = vmatpush2.bf16.msra.mxu0 0
    %2875 = vmatprep.subr.bf16.mxu0 0
    %2876 = vmatpush2.bf16.msra.mxu0 0
    %2877 = vmatprep.subr.bf16.mxu0 0
    %2878 = vmatpush2.bf16.msra.mxu0 0
    %2879 = vmatprep.subr.bf16.mxu0 0
    %2880 = vmatpush2.bf16.msra.mxu0 0
    %2881 = vmatprep.subr.bf16.mxu0 0
    %2882 = vmatpush2.bf16.msra.mxu0 0
    %2883 = vmatprep.subr.bf16.mxu0 0
    %2884 = vmatpush2.bf16.msra.mxu0 0
    %2885 = vmatprep.subr.bf16.mxu0 0
    %2886 = vmatpush2.bf16.msra.mxu0 0
    %2887 = vmatprep.subr.bf16.mxu0 0
    %2888 = vmatpush2.bf16.msra.mxu0 0
    %2889 = vmatprep.mubr.bf16.mxu0 0
    %2890 = vmatmul.mubr.bf16.gmra.mxu0 %v2855
    %v2891 = vpop.f32.mrf.mxu0
    %v2892 = vadd.f32 %v2828, %v2891
    %v2893 = vpop.f32.mrf.mxu0
    %v2894 = vpop.f32.mrf.mxu0
    %v2895 = vpop.f32.mrf.mxu0
    %2896 = vdwg.mxu0
    %2897 = vst [vmem:[#allocation16] sm:$0x3f] 0.0
    %vm2898 = vcmask 517120
    %2899 = vst.msk [vmem:[#allocation16] sm:$0x3] %vm2898, %v2591
    %2900 = vst.msk [vmem:[#allocation16 + $0x2] sm:$0x3] %vm2898, %v2821
    %2901 = vst [vmem:[#allocation16 + $0x4] sm:$0x3] %v2892
    // Predicated region
    $region66: #{tpu_custom_call.1} parent=1 // pred_check
      _
    $region67: #{tpu_custom_call.1} parent=1 // pred_check_branch
      %2903 = sbr.rel (0) target = $region69
    $region68: #{tpu_custom_call.1} parent=1 // pred_region
      %s2905 = ssub.s32 96, 96
      %2906 = vsyncadd [#allocation4], %s2905
      %s2908 = sshll.u32 [#allocation16], 4
      %s2909 = int_to_ptr.vmem [resolvable:$true] %s2908
      %2911 = dma.vmem_to_hbm [thread:$0]  %s2909, 96, %s8, [#allocation4]
    $region69: #{tpu_custom_call.1} parent=1 // pred_fallthru
      _
    // Predicated region
    $region70: #{tpu_custom_call.1} parent=1 // pred_check
      _
    $region71: #{tpu_custom_call.1} parent=1 // pred_check_branch
      %2913 = sbr.rel (0) target = $region73
    $region72: #{tpu_custom_call.1} parent=1 // pred_region
      %2914 = dma.done [#allocation4], 96
    $region73: #{tpu_custom_call.1} parent=1 // pred_fallthru
      _
    %2915 = vsyncpa [#allocation3], 1
    %2916 = vsyncpa [#allocation6], 1
    %2917 = vsyncpa [#allocation9], 1
    %2918 = vsyncpa [#allocation12], 1
    %2919 = vsyncpa [#allocation15], 1
    %2920 = vsyncpa [#allocation4], 1

</llo_original>
